<compile_context>
chip_gen: v7x
topology: tpu7x:2x2x1
jax: 0.10.0
libtpu: 0.0.40
codegen_flags: <defaults>
</compile_context>

<pallas_src>
import jax
import jax.numpy as jnp
from jax.experimental import pallas as pl
from jax.experimental.pallas import tpu as pltpu

IN_FEATURES = 32 * 32 * 3   # 3072
OUT_FEATURES = 10
N_PAD = 128                 # lane-dense padded output width (single MXU pass)


def _round_up(n, m):
    return ((n + m - 1) // m) * m


def _svm_kernel(x_ref, w_ref, b_ref, o_ref):
    # x_ref: (TM, K) bf16, w_ref: (K, N_PAD) bf16, b_ref: (1, N_PAD) f32,
    # o_ref: (TM, N_PAD) f32.  MXU matmul with f32 accumulation.
    acc = jnp.dot(x_ref[...], w_ref[...], preferred_element_type=jnp.float32)
    o_ref[...] = acc + b_ref[...]


def prepare_params(weight, bias):
    """One-time prep of nn.Linear params: transpose + zero-pad 10 -> 128.

    weight: (10, 3072), bias: (10,).  Returns w_t bf16 (3072, 128) and
    b2 f32 (1, 128).  Call once at init, not per forward.
    """
    w_t = jnp.zeros((IN_FEATURES, N_PAD), jnp.bfloat16)
    w_t = w_t.at[:, :OUT_FEATURES].set(weight.T.astype(jnp.bfloat16))
    b2 = jnp.zeros((1, N_PAD), jnp.float32)
    b2 = b2.at[:, :OUT_FEATURES].set(bias.astype(jnp.float32))
    return w_t, b2


def svm_forward(x, w_padded, b_padded, *, tm=2048):
    """x: (B, 3, 32, 32); w_padded/b_padded from prepare_params().

    Returns (B, 10) f32 logits = x.view(B, -1) @ W^T + b
    (bf16 streaming, f32 accumulation).
    """
    B = x.shape[0]
    # Flatten (matches torch .view) and stream in bf16 to halve HBM traffic.
    x_flat = x.reshape(B, -1).astype(jnp.bfloat16)   # (B, 3072)

    # Batch tile: multiple of 8, >= 2 tiles when B > 8 (keeps both v7x
    # TensorCores busy), capped at `tm`.  If a single tile covers everything,
    # use the full extent (block == array dim, no padding needed).
    TM = min(tm, max(8, _round_up(pl.cdiv(B, 2), 8)))
    if TM >= B:
        TM = B
    grid = (pl.cdiv(B, TM),)

    # Double-buffered footprint + headroom (stays well inside v7x's 64 MiB).
    x_tile_bytes = TM * IN_FEATURES * 2
    w_bytes = IN_FEATURES * N_PAD * 2
    b_bytes = N_PAD * 4
    out_tile_bytes = TM * N_PAD * 4
    vmem_limit = max(
        16 << 20,
        2 * (x_tile_bytes + w_bytes + b_bytes + out_tile_bytes) + (4 << 20),
    )

    cost = pl.CostEstimate(
        flops=2 * B * IN_FEATURES * OUT_FEATURES,
        transcendentals=0,
        bytes_accessed=(B * IN_FEATURES * 2        # x (bf16)
                        + IN_FEATURES * N_PAD * 2  # W (bf16)
                        + B * N_PAD * 4),          # out (f32)
    )

    out = pl.pallas_call(
        _svm_kernel,
        out_shape=jax.ShapeDtypeStruct((B, N_PAD), jnp.float32),
        grid_spec=pl.GridSpec(
            grid=grid,
            in_specs=[
                pl.BlockSpec((TM, IN_FEATURES), lambda i: (i, 0)),     # x: streamed
                pl.BlockSpec((IN_FEATURES, N_PAD), lambda i: (0, 0)),  # W: resident
                pl.BlockSpec((1, N_PAD), lambda i: (0, 0)),            # b: resident
            ],
            out_specs=pl.BlockSpec((TM, N_PAD), lambda i: (i, 0)),
        ),
        compiler_params=pltpu.CompilerParams(
            dimension_semantics=("parallel",),
            vmem_limit_bytes=vmem_limit,
        ),
        cost_estimate=cost,
    )(x_flat, w_padded, b_padded)

    return out[:, :OUT_FEATURES]


def init_params(key):
    # Deterministic init mimicking nn.Linear defaults: U(-1/sqrt(fan_in), ...)
    kw, kb = jax.random.split(key)
    bound = 1.0 / jnp.sqrt(jnp.float32(IN_FEATURES))
    weight = jax.random.uniform(
        kw, (OUT_FEATURES, IN_FEATURES), jnp.float32, -bound, bound)
    bias = jax.random.uniform(
        kb, (OUT_FEATURES,), jnp.float32, -bound, bound)
    return weight, bias


if __name__ == "__main__":
    key = jax.random.PRNGKey(0)
    kx, kp, kx2 = jax.random.split(key, 3)

    weight, bias = init_params(kp)
    w_padded, b_padded = prepare_params(weight, bias)   # hoisted: done once

    def ref_bf16(xx):
        # Same math as the kernel: bf16 inputs, f32 accumulation, f32 bias.
        xf = xx.reshape(xx.shape[0], -1).astype(jnp.bfloat16)
        return jnp.dot(xf, weight.T.astype(jnp.bfloat16),
                       preferred_element_type=jnp.float32) + bias

    # Small shape consistent with the module: batch=2, 3x32x32 input.
    B = 2
    x = jax.random.normal(kx, (B, 3, 32, 32), jnp.float32)
    y = jax.block_until_ready(svm_forward(x, w_padded, b_padded))
    assert y.shape == (B, OUT_FEATURES)
    assert jnp.allclose(y, ref_bf16(x), atol=1e-3, rtol=1e-3)
    # Loose check against the exact f32 nn.Linear forward (bf16 rounding).
    assert jnp.allclose(y, x.reshape(B, -1) @ weight.T + bias,
                        atol=5e-2, rtol=5e-2)

    # Multi-tile + ragged-final-block path: batch not divisible by the tile.
    B2 = 20
    x2 = jax.random.normal(kx2, (B2, 3, 32, 32), jnp.float32)
    y2 = jax.block_until_ready(svm_forward(x2, w_padded, b_padded, tm=8))
    assert y2.shape == (B2, OUT_FEATURES)
    assert jnp.allclose(y2, ref_bf16(x2), atol=1e-3, rtol=1e-3)

    # Default tile selection (>=2 tiles for v7x megacore) on the same batch.
    y3 = jax.block_until_ready(svm_forward(x2, w_padded, b_padded))
    assert jnp.allclose(y3, ref_bf16(x2), atol=1e-3, rtol=1e-3)

    print("KERNEL_OK")
</pallas_src>

<mosaic_0001>
module attributes {stable_mosaic.version = 11 : i64} {
  func.func @_svm_kernel(%arg0: i32, %arg1: memref<2x3072xbf16, #tpu.memory_space<vmem>>, %arg2: memref<3072x128xbf16, #tpu.memory_space<vmem>>, %arg3: memref<1x128xf32, #tpu.memory_space<vmem>>, %arg4: memref<2x128xf32, #tpu.memory_space<vmem>>) attributes {dimension_semantics = [#tpu.dimension_semantics<parallel>], iteration_bounds = array<i64: 1>, scalar_prefetch = 0 : i64, scratch_operands = 0 : i64, tpu.core_type = #tpu.core_type<tc>, window_params = [{transform_indices = @transform_0, window_bounds = array<i64: 2, 3072>}, {pipeline_mode = #tpu.pipeline_mode<synchronous>, transform_indices = @transform_1, window_bounds = array<i64: 3072, 128>}, {pipeline_mode = #tpu.pipeline_mode<synchronous>, transform_indices = @transform_2, window_bounds = array<i64: 1, 128>}, {transform_indices = @transform_3, window_bounds = array<i64: 2, 128>}]} {
    %c0 = arith.constant 0 : index
    %c0_0 = arith.constant 0 : index
    %0 = vector.load %arg1[%c0, %c0_0] : memref<2x3072xbf16, #tpu.memory_space<vmem>>, vector<2x3072xbf16>
    %c0_1 = arith.constant 0 : index
    %c0_2 = arith.constant 0 : index
    %1 = vector.load %arg2[%c0_1, %c0_2] : memref<3072x128xbf16, #tpu.memory_space<vmem>>, vector<3072x128xbf16>
    %cst = arith.constant dense<0.000000e+00> : vector<2x128xf32>
    %2 = tpu.matmul %0, %1, %cst {dimension_numbers = #tpu.dot_dimension_numbers<[1], [0], [0], [1], [0, 0, 1, 1], [], []>} : vector<2x3072xbf16>, vector<3072x128xbf16>, vector<2x128xf32> -> vector<2x128xf32>
    %c0_3 = arith.constant 0 : index
    %c0_4 = arith.constant 0 : index
    %3 = vector.load %arg3[%c0_3, %c0_4] : memref<1x128xf32, #tpu.memory_space<vmem>>, vector<1x128xf32>
    %4 = vector.broadcast %3 : vector<1x128xf32> to vector<2x128xf32>
    %5 = arith.addf %2, %4 : vector<2x128xf32>
    %c0_5 = arith.constant 0 : index
    %c0_6 = arith.constant 0 : index
    %6 = vector.load %arg4[%c0_5, %c0_6] : memref<2x128xf32, #tpu.memory_space<vmem>>, vector<2x128xf32>
    tpu.vector_store %arg4[%c0_5, %c0_6], %5 {strides = array<i32>} : memref<2x128xf32, #tpu.memory_space<vmem>>, vector<2x128xf32>,
    return
  }
  func.func @transform_0(%arg0: i32) -> (i32, i32) {
    %c0_i32 = arith.constant 0 : i32
    %c0_i32_0 = arith.constant 0 : i32
    return %arg0, %c0_i32 : i32, i32
  }
  func.func @transform_1(%arg0: i32) -> (i32, i32) {
    %c0_i32 = arith.constant 0 : i32
    %c0_i32_0 = arith.constant 0 : i32
    %c0_i32_1 = arith.constant 0 : i32
    return %c0_i32, %c0_i32_0 : i32, i32
  }
  func.func @transform_2(%arg0: i32) -> (i32, i32) {
    %c0_i32 = arith.constant 0 : i32
    %c0_i32_0 = arith.constant 0 : i32
    %c0_i32_1 = arith.constant 0 : i32
    return %c0_i32, %c0_i32_0 : i32, i32
  }
  func.func @transform_3(%arg0: i32) -> (i32, i32) {
    %c0_i32 = arith.constant 0 : i32
    %c0_i32_0 = arith.constant 0 : i32
    return %arg0, %c0_i32 : i32, i32
  }
}

</mosaic_0001>

<llo_original>
// kernel: tpu_custom_call.1
$region0: #{tpu_custom_call.1}
  #allocation0 [shape = 'u32[]', space=smem, size = 0x4, offset = 0x4, fixed_abs, tag = 'smem constant byte address 0x4 - core index']
  #allocation1 [shape = 'u32[144,128]{1,0:T(1,128)}', space=vmem, size = 0x12000, scoped, tag = 'internal scratch']
  %s0 = inlined_call_operand.hbm [shape: bf16[2,3072], index: 0, kind: input, shape index: {}]
  %s1 = inlined_call_operand.hbm [shape: bf16[3072,128], index: 1, kind: input, shape index: {}]
  %s2 = inlined_call_operand.vmem [shape: f32[1,128], index: 2, kind: input, shape index: {}]
  %s3 = inlined_call_operand.hbm [shape: f32[2,128], index: 3, kind: output, shape index: {}]
  %s4 = sld [smem:[#allocation0]]
  $region30: #{tpu_custom_call.1} parent=0
    _
  %s6 = ssub.s32 1, %s4
  %s7 = scalar_select 0, %s6, %s4
  $region1: #{tpu_custom_call.1} parent=0
    #allocation2 [shape = 'u8[12288]{0}', space=vmem, size = 0x3000, scoped, tag = 'input window, operand 0, single buffered']
    #allocation3 [shape = 's32[1]{0}', space=sflag, size = 0x4, scoped, tag = 'scoped memory for tpu_custom_call.1']
    #allocation4 [shape = 's32[1]{0}', space=sflag, size = 0x4, scoped, tag = 'scoped memory for tpu_custom_call.1']
    #allocation5 [shape = 'u8[786432]{0}', space=vmem, size = 0xc0000, scoped, tag = 'input window, operand 1, single buffered']
    #allocation6 [shape = 's32[1]{0}', space=sflag, size = 0x4, scoped, tag = 'scoped memory for tpu_custom_call.1']
    #allocation7 [shape = 'u8[1024]{0}', space=vmem, size = 0x400, scoped, tag = 'output window, operand 0, single buffered']
    %8 = vsyncpa [#allocation3], 0
    %9 = vsyncpa [#allocation6], 0
    %10 = vsyncpa [#allocation4], 0
    // Predicated region
    $region2: #{tpu_custom_call.1} parent=1 // pred_check
      _
    $region3: #{tpu_custom_call.1} parent=1 // pred_check_branch
      %12 = sbr.rel (0) target = $region5
    $region4: #{tpu_custom_call.1} parent=1 // pred_region
      %s14 = ssub.s32 384, 384
      %15 = vsyncadd [#allocation3], %s14
      %s17 = sshll.u32 [#allocation2], 4
      %s18 = int_to_ptr.vmem [resolvable:$true] %s17
      %20 = dma.hbm_to_vmem [thread:$0]  %s0, 384, %s18, [#allocation3]
    $region5: #{tpu_custom_call.1} parent=1 // pred_fallthru
      _
    // Predicated region
    $region6: #{tpu_custom_call.1} parent=1 // pred_check
      _
    $region7: #{tpu_custom_call.1} parent=1 // pred_check_branch
      %22 = sbr.rel (0) target = $region9
    $region8: #{tpu_custom_call.1} parent=1 // pred_region
      %s24 = ssub.s32 24576, 24576
      %25 = vsyncadd [#allocation6], %s24
      %s26 = sshll.u32 [#allocation5], 4
      %s27 = int_to_ptr.vmem [resolvable:$true] %s26
      %32 = dma.hbm_to_vmem [thread:$0]  %s1, 24576, %s27, [#allocation6], 64, 64, 4
    $region9: #{tpu_custom_call.1} parent=1 // pred_fallthru
      _
    // Predicated region
    $region10: #{tpu_custom_call.1} parent=1 // pred_check
      _
    $region11: #{tpu_custom_call.1} parent=1 // pred_check_branch
      %34 = sbr.rel (0) target = $region13
    $region12: #{tpu_custom_call.1} parent=1 // pred_region
      _
    $region13: #{tpu_custom_call.1} parent=1 // pred_fallthru
      _
    // Predicated region
    $region14: #{tpu_custom_call.1} parent=1 // pred_check
      _
    $region15: #{tpu_custom_call.1} parent=1 // pred_check_branch
      %36 = sbr.rel (0) target = $region17
    $region16: #{tpu_custom_call.1} parent=1 // pred_region
      %37 = dma.done [#allocation3], 384
    $region17: #{tpu_custom_call.1} parent=1 // pred_fallthru
      _
    // Predicated region
    $region18: #{tpu_custom_call.1} parent=1 // pred_check
      _
    $region19: #{tpu_custom_call.1} parent=1 // pred_check_branch
      %39 = sbr.rel (0) target = $region21
    $region20: #{tpu_custom_call.1} parent=1 // pred_region
      %40 = dma.done [#allocation6], 24576
    $region21: #{tpu_custom_call.1} parent=1 // pred_fallthru
      _
    %v42 = vld [vmem:[#allocation2] sm:$0xff]
    %v43 = vld [vmem:[#allocation2 + $0x8] sm:$0xff]
    %v44 = vld [vmem:[#allocation2 + $0x10] sm:$0xff]
    %v45 = vld [vmem:[#allocation5] sm:$0xf]
    %v46 = vld [vmem:[#allocation5 + $0x4] sm:$0xf]
    %v47 = vld [vmem:[#allocation5 + $0x8] sm:$0xf]
    %v48 = vld [vmem:[#allocation5 + $0xc] sm:$0xf]
    %v49 = vld [vmem:[#allocation5 + $0x10] sm:$0xf]
    %v50 = vld [vmem:[#allocation5 + $0x14] sm:$0xf]
    %v51 = vld [vmem:[#allocation5 + $0x18] sm:$0xf]
    %v52 = vld [vmem:[#allocation5 + $0x1c] sm:$0xf]
    %v53 = vld [vmem:[#allocation5 + $0x20] sm:$0xf]
    %v54 = vld [vmem:[#allocation5 + $0x24] sm:$0xf]
    %v55 = vld [vmem:[#allocation5 + $0x28] sm:$0xf]
    %v56 = vld [vmem:[#allocation5 + $0x2c] sm:$0xf]
    %v57 = vld [vmem:[#allocation5 + $0x30] sm:$0xf]
    %v58 = vld [vmem:[#allocation5 + $0x34] sm:$0xf]
    %v59 = vld [vmem:[#allocation5 + $0x38] sm:$0xf]
    %v60 = vld [vmem:[#allocation5 + $0x3c] sm:$0xf]
    %v61 = vld [vmem:[#allocation5 + $0x40] sm:$0xf]
    %v62 = vld [vmem:[#allocation5 + $0x44] sm:$0xf]
    %v63 = vld [vmem:[#allocation5 + $0x48] sm:$0xf]
    %v64 = vld [vmem:[#allocation5 + $0x4c] sm:$0xf]
    %v65 = vld [vmem:[#allocation5 + $0x50] sm:$0xf]
    %v66 = vld [vmem:[#allocation5 + $0x54] sm:$0xf]
    %v67 = vld [vmem:[#allocation5 + $0x58] sm:$0xf]
    %v68 = vld [vmem:[#allocation5 + $0x5c] sm:$0xf]
    %v69 = vld [vmem:[#allocation5 + $0x60] sm:$0xf]
    %v70 = vld [vmem:[#allocation5 + $0x64] sm:$0xf]
    %v71 = vld [vmem:[#allocation5 + $0x68] sm:$0xf]
    %v72 = vld [vmem:[#allocation5 + $0x6c] sm:$0xf]
    %v73 = vld [vmem:[#allocation5 + $0x70] sm:$0xf]
    %v74 = vld [vmem:[#allocation5 + $0x74] sm:$0xf]
    %v75 = vld [vmem:[#allocation5 + $0x78] sm:$0xf]
    %v76 = vld [vmem:[#allocation5 + $0x7c] sm:$0xf]
    %v77 = vld [vmem:[#allocation5 + $0x80] sm:$0xf]
    %v78 = vld [vmem:[#allocation5 + $0x84] sm:$0xf]
    %v79 = vld [vmem:[#allocation5 + $0x88] sm:$0xf]
    %v80 = vld [vmem:[#allocation5 + $0x8c] sm:$0xf]
    %v81 = vld [vmem:[#allocation5 + $0x90] sm:$0xf]
    %v82 = vld [vmem:[#allocation5 + $0x94] sm:$0xf]
    %v83 = vld [vmem:[#allocation5 + $0x98] sm:$0xf]
    %v84 = vld [vmem:[#allocation5 + $0x9c] sm:$0xf]
    %v85 = vld [vmem:[#allocation5 + $0xa0] sm:$0xf]
    %v86 = vld [vmem:[#allocation5 + $0xa4] sm:$0xf]
    %v87 = vld [vmem:[#allocation5 + $0xa8] sm:$0xf]
    %v88 = vld [vmem:[#allocation5 + $0xac] sm:$0xf]
    %v89 = vld [vmem:[#allocation5 + $0xb0] sm:$0xf]
    %v90 = vld [vmem:[#allocation5 + $0xb4] sm:$0xf]
    %v91 = vld [vmem:[#allocation5 + $0xb8] sm:$0xf]
    %v92 = vld [vmem:[#allocation5 + $0xbc] sm:$0xf]
    %v93 = vld [vmem:[#allocation5 + $0xc0] sm:$0xf]
    %v94 = vld [vmem:[#allocation5 + $0xc4] sm:$0xf]
    %v95 = vld [vmem:[#allocation5 + $0xc8] sm:$0xf]
    %v96 = vld [vmem:[#allocation5 + $0xcc] sm:$0xf]
    %v97 = vld [vmem:[#allocation5 + $0xd0] sm:$0xf]
    %v98 = vld [vmem:[#allocation5 + $0xd4] sm:$0xf]
    %v99 = vld [vmem:[#allocation5 + $0xd8] sm:$0xf]
    %v100 = vld [vmem:[#allocation5 + $0xdc] sm:$0xf]
    %v101 = vld [vmem:[#allocation5 + $0xe0] sm:$0xf]
    %v102 = vld [vmem:[#allocation5 + $0xe4] sm:$0xf]
    %v103 = vld [vmem:[#allocation5 + $0xe8] sm:$0xf]
    %v104 = vld [vmem:[#allocation5 + $0xec] sm:$0xf]
    %v105 = vld [vmem:[#allocation5 + $0xf0] sm:$0xf]
    %v106 = vld [vmem:[#allocation5 + $0xf4] sm:$0xf]
    %v107 = vld [vmem:[#allocation5 + $0xf8] sm:$0xf]
    %v108 = vld [vmem:[#allocation5 + $0xfc] sm:$0xf]
    %v109 = vld [vmem:[#allocation5 + $0x100] sm:$0xf]
    %v110 = vld [vmem:[#allocation5 + $0x104] sm:$0xf]
    %v111 = vld [vmem:[#allocation5 + $0x108] sm:$0xf]
    %v112 = vld [vmem:[#allocation5 + $0x10c] sm:$0xf]
    %v113 = vld [vmem:[#allocation5 + $0x110] sm:$0xf]
    %v114 = vld [vmem:[#allocation5 + $0x114] sm:$0xf]
    %v115 = vld [vmem:[#allocation5 + $0x118] sm:$0xf]
    %v116 = vld [vmem:[#allocation5 + $0x11c] sm:$0xf]
    %v117 = vld [vmem:[#allocation5 + $0x120] sm:$0xf]
    %v118 = vld [vmem:[#allocation5 + $0x124] sm:$0xf]
    %v119 = vld [vmem:[#allocation5 + $0x128] sm:$0xf]
    %v120 = vld [vmem:[#allocation5 + $0x12c] sm:$0xf]
    %v121 = vld [vmem:[#allocation5 + $0x130] sm:$0xf]
    %v122 = vld [vmem:[#allocation5 + $0x134] sm:$0xf]
    %v123 = vld [vmem:[#allocation5 + $0x138] sm:$0xf]
    %v124 = vld [vmem:[#allocation5 + $0x13c] sm:$0xf]
    %v125 = vld [vmem:[#allocation5 + $0x140] sm:$0xf]
    %v126 = vld [vmem:[#allocation5 + $0x144] sm:$0xf]
    %v127 = vld [vmem:[#allocation5 + $0x148] sm:$0xf]
    %v128 = vld [vmem:[#allocation5 + $0x14c] sm:$0xf]
    %v129 = vld [vmem:[#allocation5 + $0x150] sm:$0xf]
    %v130 = vld [vmem:[#allocation5 + $0x154] sm:$0xf]
    %v131 = vld [vmem:[#allocation5 + $0x158] sm:$0xf]
    %v132 = vld [vmem:[#allocation5 + $0x15c] sm:$0xf]
    %v133 = vld [vmem:[#allocation5 + $0x160] sm:$0xf]
    %v134 = vld [vmem:[#allocation5 + $0x164] sm:$0xf]
    %v135 = vld [vmem:[#allocation5 + $0x168] sm:$0xf]
    %v136 = vld [vmem:[#allocation5 + $0x16c] sm:$0xf]
    %v137 = vld [vmem:[#allocation5 + $0x170] sm:$0xf]
    %v138 = vld [vmem:[#allocation5 + $0x174] sm:$0xf]
    %v139 = vld [vmem:[#allocation5 + $0x178] sm:$0xf]
    %v140 = vld [vmem:[#allocation5 + $0x17c] sm:$0xf]
    %v141 = vld [vmem:[#allocation5 + $0x180] sm:$0xf]
    %v142 = vld [vmem:[#allocation5 + $0x184] sm:$0xf]
    %v143 = vld [vmem:[#allocation5 + $0x188] sm:$0xf]
    %v144 = vld [vmem:[#allocation5 + $0x18c] sm:$0xf]
    %v145 = vld [vmem:[#allocation5 + $0x190] sm:$0xf]
    %v146 = vld [vmem:[#allocation5 + $0x194] sm:$0xf]
    %v147 = vld [vmem:[#allocation5 + $0x198] sm:$0xf]
    %v148 = vld [vmem:[#allocation5 + $0x19c] sm:$0xf]
    %v149 = vld [vmem:[#allocation5 + $0x1a0] sm:$0xf]
    %v150 = vld [vmem:[#allocation5 + $0x1a4] sm:$0xf]
    %v151 = vld [vmem:[#allocation5 + $0x1a8] sm:$0xf]
    %v152 = vld [vmem:[#allocation5 + $0x1ac] sm:$0xf]
    %v153 = vld [vmem:[#allocation5 + $0x1b0] sm:$0xf]
    %v154 = vld [vmem:[#allocation5 + $0x1b4] sm:$0xf]
    %v155 = vld [vmem:[#allocation5 + $0x1b8] sm:$0xf]
    %v156 = vld [vmem:[#allocation5 + $0x1bc] sm:$0xf]
    %v157 = vld [vmem:[#allocation5 + $0x1c0] sm:$0xf]
    %v158 = vld [vmem:[#allocation5 + $0x1c4] sm:$0xf]
    %v159 = vld [vmem:[#allocation5 + $0x1c8] sm:$0xf]
    %v160 = vld [vmem:[#allocation5 + $0x1cc] sm:$0xf]
    %v161 = vld [vmem:[#allocation5 + $0x1d0] sm:$0xf]
    %v162 = vld [vmem:[#allocation5 + $0x1d4] sm:$0xf]
    %v163 = vld [vmem:[#allocation5 + $0x1d8] sm:$0xf]
    %v164 = vld [vmem:[#allocation5 + $0x1dc] sm:$0xf]
    %v165 = vld [vmem:[#allocation5 + $0x1e0] sm:$0xf]
    %v166 = vld [vmem:[#allocation5 + $0x1e4] sm:$0xf]
    %v167 = vld [vmem:[#allocation5 + $0x1e8] sm:$0xf]
    %v168 = vld [vmem:[#allocation5 + $0x1ec] sm:$0xf]
    %v169 = vld [vmem:[#allocation5 + $0x1f0] sm:$0xf]
    %v170 = vld [vmem:[#allocation5 + $0x1f4] sm:$0xf]
    %v171 = vld [vmem:[#allocation5 + $0x1f8] sm:$0xf]
    %v172 = vld [vmem:[#allocation5 + $0x1fc] sm:$0xf]
    %v173 = vld [vmem:[#allocation5 + $0x200] sm:$0xf]
    %v174 = vld [vmem:[#allocation5 + $0x204] sm:$0xf]
    %v175 = vld [vmem:[#allocation5 + $0x208] sm:$0xf]
    %v176 = vld [vmem:[#allocation5 + $0x20c] sm:$0xf]
    %v177 = vld [vmem:[#allocation5 + $0x210] sm:$0xf]
    %v178 = vld [vmem:[#allocation5 + $0x214] sm:$0xf]
    %v179 = vld [vmem:[#allocation5 + $0x218] sm:$0xf]
    %v180 = vld [vmem:[#allocation5 + $0x21c] sm:$0xf]
    %v181 = vld [vmem:[#allocation5 + $0x220] sm:$0xf]
    %v182 = vld [vmem:[#allocation5 + $0x224] sm:$0xf]
    %v183 = vld [vmem:[#allocation5 + $0x228] sm:$0xf]
    %v184 = vld [vmem:[#allocation5 + $0x22c] sm:$0xf]
    %v185 = vld [vmem:[#allocation5 + $0x230] sm:$0xf]
    %v186 = vld [vmem:[#allocation5 + $0x234] sm:$0xf]
    %v187 = vld [vmem:[#allocation5 + $0x238] sm:$0xf]
    %v188 = vld [vmem:[#allocation5 + $0x23c] sm:$0xf]
    %v189 = vld [vmem:[#allocation5 + $0x240] sm:$0xf]
    %v190 = vld [vmem:[#allocation5 + $0x244] sm:$0xf]
    %v191 = vld [vmem:[#allocation5 + $0x248] sm:$0xf]
    %v192 = vld [vmem:[#allocation5 + $0x24c] sm:$0xf]
    %v193 = vld [vmem:[#allocation5 + $0x250] sm:$0xf]
    %v194 = vld [vmem:[#allocation5 + $0x254] sm:$0xf]
    %v195 = vld [vmem:[#allocation5 + $0x258] sm:$0xf]
    %v196 = vld [vmem:[#allocation5 + $0x25c] sm:$0xf]
    %v197 = vld [vmem:[#allocation5 + $0x260] sm:$0xf]
    %v198 = vld [vmem:[#allocation5 + $0x264] sm:$0xf]
    %v199 = vld [vmem:[#allocation5 + $0x268] sm:$0xf]
    %v200 = vld [vmem:[#allocation5 + $0x26c] sm:$0xf]
    %v201 = vld [vmem:[#allocation5 + $0x270] sm:$0xf]
    %v202 = vld [vmem:[#allocation5 + $0x274] sm:$0xf]
    %v203 = vld [vmem:[#allocation5 + $0x278] sm:$0xf]
    %v204 = vld [vmem:[#allocation5 + $0x27c] sm:$0xf]
    %v205 = vld [vmem:[#allocation5 + $0x280] sm:$0xf]
    %v206 = vld [vmem:[#allocation5 + $0x284] sm:$0xf]
    %v207 = vld [vmem:[#allocation5 + $0x288] sm:$0xf]
    %v208 = vld [vmem:[#allocation5 + $0x28c] sm:$0xf]
    %v209 = vld [vmem:[#allocation5 + $0x290] sm:$0xf]
    %v210 = vld [vmem:[#allocation5 + $0x294] sm:$0xf]
    %v211 = vld [vmem:[#allocation5 + $0x298] sm:$0xf]
    %v212 = vld [vmem:[#allocation5 + $0x29c] sm:$0xf]
    %v213 = vld [vmem:[#allocation5 + $0x2a0] sm:$0xf]
    %v214 = vld [vmem:[#allocation5 + $0x2a4] sm:$0xf]
    %v215 = vld [vmem:[#allocation5 + $0x2a8] sm:$0xf]
    %v216 = vld [vmem:[#allocation5 + $0x2ac] sm:$0xf]
    %v217 = vld [vmem:[#allocation5 + $0x2b0] sm:$0xf]
    %v218 = vld [vmem:[#allocation5 + $0x2b4] sm:$0xf]
    %v219 = vld [vmem:[#allocation5 + $0x2b8] sm:$0xf]
    %v220 = vld [vmem:[#allocation5 + $0x2bc] sm:$0xf]
    %v221 = vld [vmem:[#allocation5 + $0x2c0] sm:$0xf]
    %v222 = vld [vmem:[#allocation5 + $0x2c4] sm:$0xf]
    %v223 = vld [vmem:[#allocation5 + $0x2c8] sm:$0xf]
    %v224 = vld [vmem:[#allocation5 + $0x2cc] sm:$0xf]
    %v225 = vld [vmem:[#allocation5 + $0x2d0] sm:$0xf]
    %v226 = vld [vmem:[#allocation5 + $0x2d4] sm:$0xf]
    %v227 = vld [vmem:[#allocation5 + $0x2d8] sm:$0xf]
    %v228 = vld [vmem:[#allocation5 + $0x2dc] sm:$0xf]
    %v229 = vld [vmem:[#allocation5 + $0x2e0] sm:$0xf]
    %v230 = vld [vmem:[#allocation5 + $0x2e4] sm:$0xf]
    %v231 = vld [vmem:[#allocation5 + $0x2e8] sm:$0xf]
    %v232 = vld [vmem:[#allocation5 + $0x2ec] sm:$0xf]
    %v233 = vld [vmem:[#allocation5 + $0x2f0] sm:$0xf]
    %v234 = vld [vmem:[#allocation5 + $0x2f4] sm:$0xf]
    %v235 = vld [vmem:[#allocation5 + $0x2f8] sm:$0xf]
    %v236 = vld [vmem:[#allocation5 + $0x2fc] sm:$0xf]
    %v237 = vld [vmem:[#allocation5 + $0x300] sm:$0xf]
    %v238 = vld [vmem:[#allocation5 + $0x304] sm:$0xf]
    %v239 = vld [vmem:[#allocation5 + $0x308] sm:$0xf]
    %v240 = vld [vmem:[#allocation5 + $0x30c] sm:$0xf]
    %v241 = vld [vmem:[#allocation5 + $0x310] sm:$0xf]
    %v242 = vld [vmem:[#allocation5 + $0x314] sm:$0xf]
    %v243 = vld [vmem:[#allocation5 + $0x318] sm:$0xf]
    %v244 = vld [vmem:[#allocation5 + $0x31c] sm:$0xf]
    %v245 = vld [vmem:[#allocation5 + $0x320] sm:$0xf]
    %v246 = vld [vmem:[#allocation5 + $0x324] sm:$0xf]
    %v247 = vld [vmem:[#allocation5 + $0x328] sm:$0xf]
    %v248 = vld [vmem:[#allocation5 + $0x32c] sm:$0xf]
    %v249 = vld [vmem:[#allocation5 + $0x330] sm:$0xf]
    %v250 = vld [vmem:[#allocation5 + $0x334] sm:$0xf]
    %v251 = vld [vmem:[#allocation5 + $0x338] sm:$0xf]
    %v252 = vld [vmem:[#allocation5 + $0x33c] sm:$0xf]
    %v253 = vld [vmem:[#allocation5 + $0x340] sm:$0xf]
    %v254 = vld [vmem:[#allocation5 + $0x344] sm:$0xf]
    %v255 = vld [vmem:[#allocation5 + $0x348] sm:$0xf]
    %v256 = vld [vmem:[#allocation5 + $0x34c] sm:$0xf]
    %v257 = vld [vmem:[#allocation5 + $0x350] sm:$0xf]
    %v258 = vld [vmem:[#allocation5 + $0x354] sm:$0xf]
    %v259 = vld [vmem:[#allocation5 + $0x358] sm:$0xf]
    %v260 = vld [vmem:[#allocation5 + $0x35c] sm:$0xf]
    %v261 = vld [vmem:[#allocation5 + $0x360] sm:$0xf]
    %v262 = vld [vmem:[#allocation5 + $0x364] sm:$0xf]
    %v263 = vld [vmem:[#allocation5 + $0x368] sm:$0xf]
    %v264 = vld [vmem:[#allocation5 + $0x36c] sm:$0xf]
    %v265 = vld [vmem:[#allocation5 + $0x370] sm:$0xf]
    %v266 = vld [vmem:[#allocation5 + $0x374] sm:$0xf]
    %v267 = vld [vmem:[#allocation5 + $0x378] sm:$0xf]
    %v268 = vld [vmem:[#allocation5 + $0x37c] sm:$0xf]
    %v269 = vld [vmem:[#allocation5 + $0x380] sm:$0xf]
    %v270 = vld [vmem:[#allocation5 + $0x384] sm:$0xf]
    %v271 = vld [vmem:[#allocation5 + $0x388] sm:$0xf]
    %v272 = vld [vmem:[#allocation5 + $0x38c] sm:$0xf]
    %v273 = vld [vmem:[#allocation5 + $0x390] sm:$0xf]
    %v274 = vld [vmem:[#allocation5 + $0x394] sm:$0xf]
    %v275 = vld [vmem:[#allocation5 + $0x398] sm:$0xf]
    %v276 = vld [vmem:[#allocation5 + $0x39c] sm:$0xf]
    %v277 = vld [vmem:[#allocation5 + $0x3a0] sm:$0xf]
    %v278 = vld [vmem:[#allocation5 + $0x3a4] sm:$0xf]
    %v279 = vld [vmem:[#allocation5 + $0x3a8] sm:$0xf]
    %v280 = vld [vmem:[#allocation5 + $0x3ac] sm:$0xf]
    %v281 = vld [vmem:[#allocation5 + $0x3b0] sm:$0xf]
    %v282 = vld [vmem:[#allocation5 + $0x3b4] sm:$0xf]
    %v283 = vld [vmem:[#allocation5 + $0x3b8] sm:$0xf]
    %v284 = vld [vmem:[#allocation5 + $0x3bc] sm:$0xf]
    %v285 = vld [vmem:[#allocation5 + $0x3c0] sm:$0xf]
    %v286 = vld [vmem:[#allocation5 + $0x3c4] sm:$0xf]
    %v287 = vld [vmem:[#allocation5 + $0x3c8] sm:$0xf]
    %v288 = vld [vmem:[#allocation5 + $0x3cc] sm:$0xf]
    %v289 = vld [vmem:[#allocation5 + $0x3d0] sm:$0xf]
    %v290 = vld [vmem:[#allocation5 + $0x3d4] sm:$0xf]
    %v291 = vld [vmem:[#allocation5 + $0x3d8] sm:$0xf]
    %v292 = vld [vmem:[#allocation5 + $0x3dc] sm:$0xf]
    %v293 = vld [vmem:[#allocation5 + $0x3e0] sm:$0xf]
    %v294 = vld [vmem:[#allocation5 + $0x3e4] sm:$0xf]
    %v295 = vld [vmem:[#allocation5 + $0x3e8] sm:$0xf]
    %v296 = vld [vmem:[#allocation5 + $0x3ec] sm:$0xf]
    %v297 = vld [vmem:[#allocation5 + $0x3f0] sm:$0xf]
    %v298 = vld [vmem:[#allocation5 + $0x3f4] sm:$0xf]
    %v299 = vld [vmem:[#allocation5 + $0x3f8] sm:$0xf]
    %v300 = vld [vmem:[#allocation5 + $0x3fc] sm:$0xf]
    %v301 = vld [vmem:[#allocation5 + $0x400] sm:$0xf]
    %v302 = vld [vmem:[#allocation5 + $0x404] sm:$0xf]
    %v303 = vld [vmem:[#allocation5 + $0x408] sm:$0xf]
    %v304 = vld [vmem:[#allocation5 + $0x40c] sm:$0xf]
    %v305 = vld [vmem:[#allocation5 + $0x410] sm:$0xf]
    %v306 = vld [vmem:[#allocation5 + $0x414] sm:$0xf]
    %v307 = vld [vmem:[#allocation5 + $0x418] sm:$0xf]
    %v308 = vld [vmem:[#allocation5 + $0x41c] sm:$0xf]
    %v309 = vld [vmem:[#allocation5 + $0x420] sm:$0xf]
    %v310 = vld [vmem:[#allocation5 + $0x424] sm:$0xf]
    %v311 = vld [vmem:[#allocation5 + $0x428] sm:$0xf]
    %v312 = vld [vmem:[#allocation5 + $0x42c] sm:$0xf]
    %v313 = vld [vmem:[#allocation5 + $0x430] sm:$0xf]
    %v314 = vld [vmem:[#allocation5 + $0x434] sm:$0xf]
    %v315 = vld [vmem:[#allocation5 + $0x438] sm:$0xf]
    %v316 = vld [vmem:[#allocation5 + $0x43c] sm:$0xf]
    %v317 = vld [vmem:[#allocation5 + $0x440] sm:$0xf]
    %v318 = vld [vmem:[#allocation5 + $0x444] sm:$0xf]
    %v319 = vld [vmem:[#allocation5 + $0x448] sm:$0xf]
    %v320 = vld [vmem:[#allocation5 + $0x44c] sm:$0xf]
    %v321 = vld [vmem:[#allocation5 + $0x450] sm:$0xf]
    %v322 = vld [vmem:[#allocation5 + $0x454] sm:$0xf]
    %v323 = vld [vmem:[#allocation5 + $0x458] sm:$0xf]
    %v324 = vld [vmem:[#allocation5 + $0x45c] sm:$0xf]
    %v325 = vld [vmem:[#allocation5 + $0x460] sm:$0xf]
    %v326 = vld [vmem:[#allocation5 + $0x464] sm:$0xf]
    %v327 = vld [vmem:[#allocation5 + $0x468] sm:$0xf]
    %v328 = vld [vmem:[#allocation5 + $0x46c] sm:$0xf]
    %v329 = vld [vmem:[#allocation5 + $0x470] sm:$0xf]
    %v330 = vld [vmem:[#allocation5 + $0x474] sm:$0xf]
    %v331 = vld [vmem:[#allocation5 + $0x478] sm:$0xf]
    %v332 = vld [vmem:[#allocation5 + $0x47c] sm:$0xf]
    %v333 = vld [vmem:[#allocation5 + $0x480] sm:$0xf]
    %v334 = vld [vmem:[#allocation5 + $0x484] sm:$0xf]
    %v335 = vld [vmem:[#allocation5 + $0x488] sm:$0xf]
    %v336 = vld [vmem:[#allocation5 + $0x48c] sm:$0xf]
    %v337 = vld [vmem:[#allocation5 + $0x490] sm:$0xf]
    %v338 = vld [vmem:[#allocation5 + $0x494] sm:$0xf]
    %v339 = vld [vmem:[#allocation5 + $0x498] sm:$0xf]
    %v340 = vld [vmem:[#allocation5 + $0x49c] sm:$0xf]
    %v341 = vld [vmem:[#allocation5 + $0x4a0] sm:$0xf]
    %v342 = vld [vmem:[#allocation5 + $0x4a4] sm:$0xf]
    %v343 = vld [vmem:[#allocation5 + $0x4a8] sm:$0xf]
    %v344 = vld [vmem:[#allocation5 + $0x4ac] sm:$0xf]
    %v345 = vld [vmem:[#allocation5 + $0x4b0] sm:$0xf]
    %v346 = vld [vmem:[#allocation5 + $0x4b4] sm:$0xf]
    %v347 = vld [vmem:[#allocation5 + $0x4b8] sm:$0xf]
    %v348 = vld [vmem:[#allocation5 + $0x4bc] sm:$0xf]
    %v349 = vld [vmem:[#allocation5 + $0x4c0] sm:$0xf]
    %v350 = vld [vmem:[#allocation5 + $0x4c4] sm:$0xf]
    %v351 = vld [vmem:[#allocation5 + $0x4c8] sm:$0xf]
    %v352 = vld [vmem:[#allocation5 + $0x4cc] sm:$0xf]
    %v353 = vld [vmem:[#allocation5 + $0x4d0] sm:$0xf]
    %v354 = vld [vmem:[#allocation5 + $0x4d4] sm:$0xf]
    %v355 = vld [vmem:[#allocation5 + $0x4d8] sm:$0xf]
    %v356 = vld [vmem:[#allocation5 + $0x4dc] sm:$0xf]
    %v357 = vld [vmem:[#allocation5 + $0x4e0] sm:$0xf]
    %v358 = vld [vmem:[#allocation5 + $0x4e4] sm:$0xf]
    %v359 = vld [vmem:[#allocation5 + $0x4e8] sm:$0xf]
    %v360 = vld [vmem:[#allocation5 + $0x4ec] sm:$0xf]
    %v361 = vld [vmem:[#allocation5 + $0x4f0] sm:$0xf]
    %v362 = vld [vmem:[#allocation5 + $0x4f4] sm:$0xf]
    %v363 = vld [vmem:[#allocation5 + $0x4f8] sm:$0xf]
    %v364 = vld [vmem:[#allocation5 + $0x4fc] sm:$0xf]
    %v365 = vld [vmem:[#allocation5 + $0x500] sm:$0xf]
    %v366 = vld [vmem:[#allocation5 + $0x504] sm:$0xf]
    %v367 = vld [vmem:[#allocation5 + $0x508] sm:$0xf]
    %v368 = vld [vmem:[#allocation5 + $0x50c] sm:$0xf]
    %v369 = vld [vmem:[#allocation5 + $0x510] sm:$0xf]
    %v370 = vld [vmem:[#allocation5 + $0x514] sm:$0xf]
    %v371 = vld [vmem:[#allocation5 + $0x518] sm:$0xf]
    %v372 = vld [vmem:[#allocation5 + $0x51c] sm:$0xf]
    %v373 = vld [vmem:[#allocation5 + $0x520] sm:$0xf]
    %v374 = vld [vmem:[#allocation5 + $0x524] sm:$0xf]
    %v375 = vld [vmem:[#allocation5 + $0x528] sm:$0xf]
    %v376 = vld [vmem:[#allocation5 + $0x52c] sm:$0xf]
    %v377 = vld [vmem:[#allocation5 + $0x530] sm:$0xf]
    %v378 = vld [vmem:[#allocation5 + $0x534] sm:$0xf]
    %v379 = vld [vmem:[#allocation5 + $0x538] sm:$0xf]
    %v380 = vld [vmem:[#allocation5 + $0x53c] sm:$0xf]
    %v381 = vld [vmem:[#allocation5 + $0x540] sm:$0xf]
    %v382 = vld [vmem:[#allocation5 + $0x544] sm:$0xf]
    %v383 = vld [vmem:[#allocation5 + $0x548] sm:$0xf]
    %v384 = vld [vmem:[#allocation5 + $0x54c] sm:$0xf]
    %v385 = vld [vmem:[#allocation5 + $0x550] sm:$0xf]
    %v386 = vld [vmem:[#allocation5 + $0x554] sm:$0xf]
    %v387 = vld [vmem:[#allocation5 + $0x558] sm:$0xf]
    %v388 = vld [vmem:[#allocation5 + $0x55c] sm:$0xf]
    %v389 = vld [vmem:[#allocation5 + $0x560] sm:$0xf]
    %v390 = vld [vmem:[#allocation5 + $0x564] sm:$0xf]
    %v391 = vld [vmem:[#allocation5 + $0x568] sm:$0xf]
    %v392 = vld [vmem:[#allocation5 + $0x56c] sm:$0xf]
    %v393 = vld [vmem:[#allocation5 + $0x570] sm:$0xf]
    %v394 = vld [vmem:[#allocation5 + $0x574] sm:$0xf]
    %v395 = vld [vmem:[#allocation5 + $0x578] sm:$0xf]
    %v396 = vld [vmem:[#allocation5 + $0x57c] sm:$0xf]
    %v397 = vld [vmem:[#allocation5 + $0x580] sm:$0xf]
    %v398 = vld [vmem:[#allocation5 + $0x584] sm:$0xf]
    %v399 = vld [vmem:[#allocation5 + $0x588] sm:$0xf]
    %v400 = vld [vmem:[#allocation5 + $0x58c] sm:$0xf]
    %v401 = vld [vmem:[#allocation5 + $0x590] sm:$0xf]
    %v402 = vld [vmem:[#allocation5 + $0x594] sm:$0xf]
    %v403 = vld [vmem:[#allocation5 + $0x598] sm:$0xf]
    %v404 = vld [vmem:[#allocation5 + $0x59c] sm:$0xf]
    %v405 = vld [vmem:[#allocation5 + $0x5a0] sm:$0xf]
    %v406 = vld [vmem:[#allocation5 + $0x5a4] sm:$0xf]
    %v407 = vld [vmem:[#allocation5 + $0x5a8] sm:$0xf]
    %v408 = vld [vmem:[#allocation5 + $0x5ac] sm:$0xf]
    %v409 = vld [vmem:[#allocation5 + $0x5b0] sm:$0xf]
    %v410 = vld [vmem:[#allocation5 + $0x5b4] sm:$0xf]
    %v411 = vld [vmem:[#allocation5 + $0x5b8] sm:$0xf]
    %v412 = vld [vmem:[#allocation5 + $0x5bc] sm:$0xf]
    %v413 = vld [vmem:[#allocation5 + $0x5c0] sm:$0xf]
    %v414 = vld [vmem:[#allocation5 + $0x5c4] sm:$0xf]
    %v415 = vld [vmem:[#allocation5 + $0x5c8] sm:$0xf]
    %v416 = vld [vmem:[#allocation5 + $0x5cc] sm:$0xf]
    %v417 = vld [vmem:[#allocation5 + $0x5d0] sm:$0xf]
    %v418 = vld [vmem:[#allocation5 + $0x5d4] sm:$0xf]
    %v419 = vld [vmem:[#allocation5 + $0x5d8] sm:$0xf]
    %v420 = vld [vmem:[#allocation5 + $0x5dc] sm:$0xf]
    %v421 = vld [vmem:[#allocation5 + $0x5e0] sm:$0xf]
    %v422 = vld [vmem:[#allocation5 + $0x5e4] sm:$0xf]
    %v423 = vld [vmem:[#allocation5 + $0x5e8] sm:$0xf]
    %v424 = vld [vmem:[#allocation5 + $0x5ec] sm:$0xf]
    %v425 = vld [vmem:[#allocation5 + $0x5f0] sm:$0xf]
    %v426 = vld [vmem:[#allocation5 + $0x5f4] sm:$0xf]
    %v427 = vld [vmem:[#allocation5 + $0x5f8] sm:$0xf]
    %v428 = vld [vmem:[#allocation5 + $0x5fc] sm:$0xf]
    %v429 = vld [vmem:[%s2] sm:$0x1]
    %v431 = vlaneseq
    %v432 = vshrl.u32 %v431, 7
    %v433 = vsub.s32 0, %v432
    %v434 = vrot.slane %v429, %v433
    %v439 = vcombine.high %v42, %v42
    %v441 = vunpack.c.l.s4 1966171168
    %v442 = vunpack.c.0.s8 %v441
    %v443 = vlaneseq
    %v444 = vshrl.u32 %v443, 7
    %v445 = vsub.s32 %v442, %v444
    %v446 = vrot.slane %v42, %v445
    %v448 = vunpack.c.l.s4 1966171168
    %v449 = vunpack.c.0.s8 %v448
    %v450 = vlaneseq
    %v451 = vshrl.u32 %v450, 7
    %v452 = vsub.s32 %v449, %v451
    %v453 = vrot.slane %v439, %v452
    %v454 = vcombine.high %v446, %v446
    %v455 = vcombine.high %v453, %v453
    %v457 = vunpack.c.l.s4 1966171168
    %v458 = vunpack.c.0.s8 %v457
    %v459 = vlaneseq
    %v460 = vshrl.u32 %v459, 7
    %v461 = vsub.s32 %v458, %v460
    %v462 = vrot.slane %v446, %v461
    %v464 = vunpack.c.l.s4 1966171168
    %v465 = vunpack.c.0.s8 %v464
    %v466 = vlaneseq
    %v467 = vshrl.u32 %v466, 7
    %v468 = vsub.s32 %v465, %v467
    %v469 = vrot.slane %v453, %v468
    %v471 = vunpack.c.l.s4 1966171168
    %v472 = vunpack.c.0.s8 %v471
    %v473 = vlaneseq
    %v474 = vshrl.u32 %v473, 7
    %v475 = vsub.s32 %v472, %v474
    %v476 = vrot.slane %v454, %v475
    %v478 = vunpack.c.l.s4 1966171168
    %v479 = vunpack.c.0.s8 %v478
    %v480 = vlaneseq
    %v481 = vshrl.u32 %v480, 7
    %v482 = vsub.s32 %v479, %v481
    %v483 = vrot.slane %v455, %v482
    %v484 = vcombine.high %v462, %v462
    %v485 = vcombine.high %v469, %v469
    %v486 = vcombine.high %v476, %v476
    %v487 = vcombine.high %v483, %v483
    %v488 = vcombine.high %v43, %v43
    %v490 = vunpack.c.l.s4 1966171168
    %v491 = vunpack.c.0.s8 %v490
    %v492 = vlaneseq
    %v493 = vshrl.u32 %v492, 7
    %v494 = vsub.s32 %v491, %v493
    %v495 = vrot.slane %v43, %v494
    %v497 = vunpack.c.l.s4 1966171168
    %v498 = vunpack.c.0.s8 %v497
    %v499 = vlaneseq
    %v500 = vshrl.u32 %v499, 7
    %v501 = vsub.s32 %v498, %v500
    %v502 = vrot.slane %v488, %v501
    %v503 = vcombine.high %v495, %v495
    %v504 = vcombine.high %v502, %v502
    %v506 = vunpack.c.l.s4 1966171168
    %v507 = vunpack.c.0.s8 %v506
    %v508 = vlaneseq
    %v509 = vshrl.u32 %v508, 7
    %v510 = vsub.s32 %v507, %v509
    %v511 = vrot.slane %v495, %v510
    %v513 = vunpack.c.l.s4 1966171168
    %v514 = vunpack.c.0.s8 %v513
    %v515 = vlaneseq
    %v516 = vshrl.u32 %v515, 7
    %v517 = vsub.s32 %v514, %v516
    %v518 = vrot.slane %v502, %v517
    %v520 = vunpack.c.l.s4 1966171168
    %v521 = vunpack.c.0.s8 %v520
    %v522 = vlaneseq
    %v523 = vshrl.u32 %v522, 7
    %v524 = vsub.s32 %v521, %v523
    %v525 = vrot.slane %v503, %v524
    %v527 = vunpack.c.l.s4 1966171168
    %v528 = vunpack.c.0.s8 %v527
    %v529 = vlaneseq
    %v530 = vshrl.u32 %v529, 7
    %v531 = vsub.s32 %v528, %v530
    %v532 = vrot.slane %v504, %v531
    %v533 = vcombine.high %v511, %v511
    %v534 = vcombine.high %v518, %v518
    %v535 = vcombine.high %v525, %v525
    %v536 = vcombine.high %v532, %v532
    %v537 = vcombine.high %v44, %v44
    %v539 = vunpack.c.l.s4 1966171168
    %v540 = vunpack.c.0.s8 %v539
    %v541 = vlaneseq
    %v542 = vshrl.u32 %v541, 7
    %v543 = vsub.s32 %v540, %v542
    %v544 = vrot.slane %v44, %v543
    %v546 = vunpack.c.l.s4 1966171168
    %v547 = vunpack.c.0.s8 %v546
    %v548 = vlaneseq
    %v549 = vshrl.u32 %v548, 7
    %v550 = vsub.s32 %v547, %v549
    %v551 = vrot.slane %v537, %v550
    %v552 = vcombine.high %v544, %v544
    %v553 = vcombine.high %v551, %v551
    %v555 = vunpack.c.l.s4 1966171168
    %v556 = vunpack.c.0.s8 %v555
    %v557 = vlaneseq
    %v558 = vshrl.u32 %v557, 7
    %v559 = vsub.s32 %v556, %v558
    %v560 = vrot.slane %v544, %v559
    %v562 = vunpack.c.l.s4 1966171168
    %v563 = vunpack.c.0.s8 %v562
    %v564 = vlaneseq
    %v565 = vshrl.u32 %v564, 7
    %v566 = vsub.s32 %v563, %v565
    %v567 = vrot.slane %v551, %v566
    %v569 = vunpack.c.l.s4 1966171168
    %v570 = vunpack.c.0.s8 %v569
    %v571 = vlaneseq
    %v572 = vshrl.u32 %v571, 7
    %v573 = vsub.s32 %v570, %v572
    %v574 = vrot.slane %v552, %v573
    %v576 = vunpack.c.l.s4 1966171168
    %v577 = vunpack.c.0.s8 %v576
    %v578 = vlaneseq
    %v579 = vshrl.u32 %v578, 7
    %v580 = vsub.s32 %v577, %v579
    %v581 = vrot.slane %v553, %v580
    %v582 = vcombine.high %v560, %v560
    %v583 = vcombine.high %v567, %v567
    %v584 = vcombine.high %v574, %v574
    %v585 = vcombine.high %v581, %v581
    %v994 = vunpack.c.l.b16 %v45
    %v995 = vunpack.c.l.b16 %v46
    %v996 = vunpack.c.l.b16 %v47
    %v997 = vunpack.c.l.b16 %v48
    %v998 = vunpack.c.l.b16 %v49
    %v999 = vunpack.c.l.b16 %v50
    %v1000 = vunpack.c.l.b16 %v51
    %v1001 = vunpack.c.l.b16 %v52
    %v1002 = vunpack.c.l.b16 %v53
    %v1003 = vunpack.c.l.b16 %v54
    %v1004 = vunpack.c.l.b16 %v55
    %v1005 = vunpack.c.l.b16 %v56
    %v1006 = vunpack.c.l.b16 %v57
    %v1007 = vunpack.c.l.b16 %v58
    %v1008 = vunpack.c.l.b16 %v59
    %v1009 = vunpack.c.l.b16 %v60
    %v1010 = vunpack.c.l.b16 %v61
    %v1011 = vunpack.c.l.b16 %v62
    %v1012 = vunpack.c.l.b16 %v63
    %v1013 = vunpack.c.l.b16 %v64
    %v1014 = vunpack.c.l.b16 %v65
    %v1015 = vunpack.c.l.b16 %v66
    %v1016 = vunpack.c.l.b16 %v67
    %v1017 = vunpack.c.l.b16 %v68
    %v1018 = vunpack.c.l.b16 %v69
    %v1019 = vunpack.c.l.b16 %v70
    %v1020 = vunpack.c.l.b16 %v71
    %v1021 = vunpack.c.l.b16 %v72
    %v1022 = vunpack.c.l.b16 %v73
    %v1023 = vunpack.c.l.b16 %v74
    %v1024 = vunpack.c.l.b16 %v75
    %v1025 = vunpack.c.l.b16 %v76
    %v1026 = vunpack.c.l.b16 %v77
    %v1027 = vunpack.c.l.b16 %v78
    %v1028 = vunpack.c.l.b16 %v79
    %v1029 = vunpack.c.l.b16 %v80
    %v1030 = vunpack.c.l.b16 %v81
    %v1031 = vunpack.c.l.b16 %v82
    %v1032 = vunpack.c.l.b16 %v83
    %v1033 = vunpack.c.l.b16 %v84
    %v1034 = vunpack.c.l.b16 %v85
    %v1035 = vunpack.c.l.b16 %v86
    %v1036 = vunpack.c.l.b16 %v87
    %v1037 = vunpack.c.l.b16 %v88
    %v1038 = vunpack.c.l.b16 %v89
    %v1039 = vunpack.c.l.b16 %v90
    %v1040 = vunpack.c.l.b16 %v91
    %v1041 = vunpack.c.l.b16 %v92
    %v1042 = vunpack.c.l.b16 %v93
    %v1043 = vunpack.c.l.b16 %v94
    %v1044 = vunpack.c.l.b16 %v95
    %v1045 = vunpack.c.l.b16 %v96
    %v1046 = vunpack.c.l.b16 %v97
    %v1047 = vunpack.c.l.b16 %v98
    %v1048 = vunpack.c.l.b16 %v99
    %v1049 = vunpack.c.l.b16 %v100
    %v1050 = vunpack.c.l.b16 %v101
    %v1051 = vunpack.c.l.b16 %v102
    %v1052 = vunpack.c.l.b16 %v103
    %v1053 = vunpack.c.l.b16 %v104
    %v1054 = vunpack.c.l.b16 %v105
    %v1055 = vunpack.c.l.b16 %v106
    %v1056 = vunpack.c.l.b16 %v107
    %v1057 = vunpack.c.l.b16 %v108
    %v1058 = vunpack.c.l.b16 %v109
    %v1059 = vunpack.c.l.b16 %v110
    %v1060 = vunpack.c.l.b16 %v111
    %v1061 = vunpack.c.l.b16 %v112
    %v1062 = vunpack.c.l.b16 %v113
    %v1063 = vunpack.c.l.b16 %v114
    %v1064 = vunpack.c.l.b16 %v115
    %v1065 = vunpack.c.l.b16 %v116
    %v1066 = vunpack.c.l.b16 %v117
    %v1067 = vunpack.c.l.b16 %v118
    %v1068 = vunpack.c.l.b16 %v119
    %v1069 = vunpack.c.l.b16 %v120
    %v1070 = vunpack.c.l.b16 %v121
    %v1071 = vunpack.c.l.b16 %v122
    %v1072 = vunpack.c.l.b16 %v123
    %v1073 = vunpack.c.l.b16 %v124
    %v1074 = vunpack.c.l.b16 %v125
    %v1075 = vunpack.c.l.b16 %v126
    %v1076 = vunpack.c.l.b16 %v127
    %v1077 = vunpack.c.l.b16 %v128
    %v1078 = vunpack.c.l.b16 %v129
    %v1079 = vunpack.c.l.b16 %v130
    %v1080 = vunpack.c.l.b16 %v131
    %v1081 = vunpack.c.l.b16 %v132
    %v1082 = vunpack.c.l.b16 %v133
    %v1083 = vunpack.c.l.b16 %v134
    %v1084 = vunpack.c.l.b16 %v135
    %v1085 = vunpack.c.l.b16 %v136
    %v1086 = vunpack.c.l.b16 %v137
    %v1087 = vunpack.c.l.b16 %v138
    %v1088 = vunpack.c.l.b16 %v139
    %v1089 = vunpack.c.l.b16 %v140
    %v1090 = vunpack.c.l.b16 %v141
    %v1091 = vunpack.c.l.b16 %v142
    %v1092 = vunpack.c.l.b16 %v143
    %v1093 = vunpack.c.l.b16 %v144
    %v1094 = vunpack.c.l.b16 %v145
    %v1095 = vunpack.c.l.b16 %v146
    %v1096 = vunpack.c.l.b16 %v147
    %v1097 = vunpack.c.l.b16 %v148
    %v1098 = vunpack.c.l.b16 %v149
    %v1099 = vunpack.c.l.b16 %v150
    %v1100 = vunpack.c.l.b16 %v151
    %v1101 = vunpack.c.l.b16 %v152
    %v1102 = vunpack.c.l.b16 %v153
    %v1103 = vunpack.c.l.b16 %v154
    %v1104 = vunpack.c.l.b16 %v155
    %v1105 = vunpack.c.l.b16 %v156
    %v1106 = vunpack.c.l.b16 %v157
    %v1107 = vunpack.c.l.b16 %v158
    %v1108 = vunpack.c.l.b16 %v159
    %v1109 = vunpack.c.l.b16 %v160
    %v1110 = vunpack.c.l.b16 %v161
    %v1111 = vunpack.c.l.b16 %v162
    %v1112 = vunpack.c.l.b16 %v163
    %v1113 = vunpack.c.l.b16 %v164
    %v1114 = vunpack.c.l.b16 %v165
    %v1115 = vunpack.c.l.b16 %v166
    %v1116 = vunpack.c.l.b16 %v167
    %v1117 = vunpack.c.l.b16 %v168
    %v1118 = vunpack.c.l.b16 %v169
    %v1119 = vunpack.c.l.b16 %v170
    %v1120 = vunpack.c.l.b16 %v171
    %v1121 = vunpack.c.l.b16 %v172
    %v1122 = vunpack.c.l.b16 %v173
    %v1123 = vunpack.c.l.b16 %v174
    %v1124 = vunpack.c.l.b16 %v175
    %v1125 = vunpack.c.l.b16 %v176
    %v1126 = vunpack.c.l.b16 %v177
    %v1127 = vunpack.c.l.b16 %v178
    %v1128 = vunpack.c.l.b16 %v179
    %v1129 = vunpack.c.l.b16 %v180
    %v1130 = vunpack.c.l.b16 %v181
    %v1131 = vunpack.c.l.b16 %v182
    %v1132 = vunpack.c.l.b16 %v183
    %v1133 = vunpack.c.l.b16 %v184
    %v1134 = vunpack.c.l.b16 %v185
    %v1135 = vunpack.c.l.b16 %v186
    %v1136 = vunpack.c.l.b16 %v187
    %v1137 = vunpack.c.l.b16 %v188
    %v1138 = vunpack.c.l.b16 %v189
    %v1139 = vunpack.c.l.b16 %v190
    %v1140 = vunpack.c.l.b16 %v191
    %v1141 = vunpack.c.l.b16 %v192
    %v1142 = vunpack.c.l.b16 %v193
    %v1143 = vunpack.c.l.b16 %v194
    %v1144 = vunpack.c.l.b16 %v195
    %v1145 = vunpack.c.l.b16 %v196
    %v1146 = vunpack.c.l.b16 %v197
    %v1147 = vunpack.c.l.b16 %v198
    %v1148 = vunpack.c.l.b16 %v199
    %v1149 = vunpack.c.l.b16 %v200
    %v1150 = vunpack.c.l.b16 %v201
    %v1151 = vunpack.c.l.b16 %v202
    %v1152 = vunpack.c.l.b16 %v203
    %v1153 = vunpack.c.l.b16 %v204
    %v1154 = vunpack.c.l.b16 %v205
    %v1155 = vunpack.c.l.b16 %v206
    %v1156 = vunpack.c.l.b16 %v207
    %v1157 = vunpack.c.l.b16 %v208
    %v1158 = vunpack.c.l.b16 %v209
    %v1159 = vunpack.c.l.b16 %v210
    %v1160 = vunpack.c.l.b16 %v211
    %v1161 = vunpack.c.l.b16 %v212
    %v1162 = vunpack.c.l.b16 %v213
    %v1163 = vunpack.c.l.b16 %v214
    %v1164 = vunpack.c.l.b16 %v215
    %v1165 = vunpack.c.l.b16 %v216
    %v1166 = vunpack.c.l.b16 %v217
    %v1167 = vunpack.c.l.b16 %v218
    %v1168 = vunpack.c.l.b16 %v219
    %v1169 = vunpack.c.l.b16 %v220
    %v1170 = vunpack.c.l.b16 %v221
    %v1171 = vunpack.c.l.b16 %v222
    %v1172 = vunpack.c.l.b16 %v223
    %v1173 = vunpack.c.l.b16 %v224
    %v1174 = vunpack.c.l.b16 %v225
    %v1175 = vunpack.c.l.b16 %v226
    %v1176 = vunpack.c.l.b16 %v227
    %v1177 = vunpack.c.l.b16 %v228
    %v1178 = vunpack.c.l.b16 %v229
    %v1179 = vunpack.c.l.b16 %v230
    %v1180 = vunpack.c.l.b16 %v231
    %v1181 = vunpack.c.l.b16 %v232
    %v1182 = vunpack.c.l.b16 %v233
    %v1183 = vunpack.c.l.b16 %v234
    %v1184 = vunpack.c.l.b16 %v235
    %v1185 = vunpack.c.l.b16 %v236
    %v1186 = vunpack.c.l.b16 %v237
    %v1187 = vunpack.c.l.b16 %v238
    %v1188 = vunpack.c.l.b16 %v239
    %v1189 = vunpack.c.l.b16 %v240
    %v1190 = vunpack.c.l.b16 %v241
    %v1191 = vunpack.c.l.b16 %v242
    %v1192 = vunpack.c.l.b16 %v243
    %v1193 = vunpack.c.l.b16 %v244
    %v1194 = vunpack.c.l.b16 %v245
    %v1195 = vunpack.c.l.b16 %v246
    %v1196 = vunpack.c.l.b16 %v247
    %v1197 = vunpack.c.l.b16 %v248
    %v1198 = vunpack.c.l.b16 %v249
    %v1199 = vunpack.c.l.b16 %v250
    %v1200 = vunpack.c.l.b16 %v251
    %v1201 = vunpack.c.l.b16 %v252
    %v1202 = vunpack.c.l.b16 %v253
    %v1203 = vunpack.c.l.b16 %v254
    %v1204 = vunpack.c.l.b16 %v255
    %v1205 = vunpack.c.l.b16 %v256
    %v1206 = vunpack.c.l.b16 %v257
    %v1207 = vunpack.c.l.b16 %v258
    %v1208 = vunpack.c.l.b16 %v259
    %v1209 = vunpack.c.l.b16 %v260
    %v1210 = vunpack.c.l.b16 %v261
    %v1211 = vunpack.c.l.b16 %v262
    %v1212 = vunpack.c.l.b16 %v263
    %v1213 = vunpack.c.l.b16 %v264
    %v1214 = vunpack.c.l.b16 %v265
    %v1215 = vunpack.c.l.b16 %v266
    %v1216 = vunpack.c.l.b16 %v267
    %v1217 = vunpack.c.l.b16 %v268
    %v1218 = vunpack.c.l.b16 %v269
    %v1219 = vunpack.c.l.b16 %v270
    %v1220 = vunpack.c.l.b16 %v271
    %v1221 = vunpack.c.l.b16 %v272
    %v1222 = vunpack.c.l.b16 %v273
    %v1223 = vunpack.c.l.b16 %v274
    %v1224 = vunpack.c.l.b16 %v275
    %v1225 = vunpack.c.l.b16 %v276
    %v1226 = vunpack.c.l.b16 %v277
    %v1227 = vunpack.c.l.b16 %v278
    %v1228 = vunpack.c.l.b16 %v279
    %v1229 = vunpack.c.l.b16 %v280
    %v1230 = vunpack.c.l.b16 %v281
    %v1231 = vunpack.c.l.b16 %v282
    %v1232 = vunpack.c.l.b16 %v283
    %v1233 = vunpack.c.l.b16 %v284
    %v1234 = vunpack.c.l.b16 %v285
    %v1235 = vunpack.c.l.b16 %v286
    %v1236 = vunpack.c.l.b16 %v287
    %v1237 = vunpack.c.l.b16 %v288
    %v1238 = vunpack.c.l.b16 %v289
    %v1239 = vunpack.c.l.b16 %v290
    %v1240 = vunpack.c.l.b16 %v291
    %v1241 = vunpack.c.l.b16 %v292
    %v1242 = vunpack.c.l.b16 %v293
    %v1243 = vunpack.c.l.b16 %v294
    %v1244 = vunpack.c.l.b16 %v295
    %v1245 = vunpack.c.l.b16 %v296
    %v1246 = vunpack.c.l.b16 %v297
    %v1247 = vunpack.c.l.b16 %v298
    %v1248 = vunpack.c.l.b16 %v299
    %v1249 = vunpack.c.l.b16 %v300
    %v1250 = vunpack.c.l.b16 %v301
    %v1251 = vunpack.c.l.b16 %v302
    %v1252 = vunpack.c.l.b16 %v303
    %v1253 = vunpack.c.l.b16 %v304
    %v1254 = vunpack.c.l.b16 %v305
    %v1255 = vunpack.c.l.b16 %v306
    %v1256 = vunpack.c.l.b16 %v307
    %v1257 = vunpack.c.l.b16 %v308
    %v1258 = vunpack.c.l.b16 %v309
    %v1259 = vunpack.c.l.b16 %v310
    %v1260 = vunpack.c.l.b16 %v311
    %v1261 = vunpack.c.l.b16 %v312
    %v1262 = vunpack.c.l.b16 %v313
    %v1263 = vunpack.c.l.b16 %v314
    %v1264 = vunpack.c.l.b16 %v315
    %v1265 = vunpack.c.l.b16 %v316
    %v1266 = vunpack.c.l.b16 %v317
    %v1267 = vunpack.c.l.b16 %v318
    %v1268 = vunpack.c.l.b16 %v319
    %v1269 = vunpack.c.l.b16 %v320
    %v1270 = vunpack.c.l.b16 %v321
    %v1271 = vunpack.c.l.b16 %v322
    %v1272 = vunpack.c.l.b16 %v323
    %v1273 = vunpack.c.l.b16 %v324
    %v1274 = vunpack.c.l.b16 %v325
    %v1275 = vunpack.c.l.b16 %v326
    %v1276 = vunpack.c.l.b16 %v327
    %v1277 = vunpack.c.l.b16 %v328
    %v1278 = vunpack.c.l.b16 %v329
    %v1279 = vunpack.c.l.b16 %v330
    %v1280 = vunpack.c.l.b16 %v331
    %v1281 = vunpack.c.l.b16 %v332
    %v1282 = vunpack.c.l.b16 %v333
    %v1283 = vunpack.c.l.b16 %v334
    %v1284 = vunpack.c.l.b16 %v335
    %v1285 = vunpack.c.l.b16 %v336
    %v1286 = vunpack.c.l.b16 %v337
    %v1287 = vunpack.c.l.b16 %v338
    %v1288 = vunpack.c.l.b16 %v339
    %v1289 = vunpack.c.l.b16 %v340
    %v1290 = vunpack.c.l.b16 %v341
    %v1291 = vunpack.c.l.b16 %v342
    %v1292 = vunpack.c.l.b16 %v343
    %v1293 = vunpack.c.l.b16 %v344
    %v1294 = vunpack.c.l.b16 %v345
    %v1295 = vunpack.c.l.b16 %v346
    %v1296 = vunpack.c.l.b16 %v347
    %v1297 = vunpack.c.l.b16 %v348
    %v1298 = vunpack.c.l.b16 %v349
    %v1299 = vunpack.c.l.b16 %v350
    %v1300 = vunpack.c.l.b16 %v351
    %v1301 = vunpack.c.l.b16 %v352
    %v1302 = vunpack.c.l.b16 %v353
    %v1303 = vunpack.c.l.b16 %v354
    %v1304 = vunpack.c.l.b16 %v355
    %v1305 = vunpack.c.l.b16 %v356
    %v1306 = vunpack.c.l.b16 %v357
    %v1307 = vunpack.c.l.b16 %v358
    %v1308 = vunpack.c.l.b16 %v359
    %v1309 = vunpack.c.l.b16 %v360
    %v1310 = vunpack.c.l.b16 %v361
    %v1311 = vunpack.c.l.b16 %v362
    %v1312 = vunpack.c.l.b16 %v363
    %v1313 = vunpack.c.l.b16 %v364
    %v1314 = vunpack.c.l.b16 %v365
    %v1315 = vunpack.c.l.b16 %v366
    %v1316 = vunpack.c.l.b16 %v367
    %v1317 = vunpack.c.l.b16 %v368
    %v1318 = vunpack.c.l.b16 %v369
    %v1319 = vunpack.c.l.b16 %v370
    %v1320 = vunpack.c.l.b16 %v371
    %v1321 = vunpack.c.l.b16 %v372
    %v1322 = vunpack.c.l.b16 %v373
    %v1323 = vunpack.c.l.b16 %v374
    %v1324 = vunpack.c.l.b16 %v375
    %v1325 = vunpack.c.l.b16 %v376
    %v1326 = vunpack.c.l.b16 %v377
    %v1327 = vunpack.c.l.b16 %v378
    %v1328 = vunpack.c.l.b16 %v379
    %v1329 = vunpack.c.l.b16 %v380
    %v1330 = vunpack.c.l.b16 %v381
    %v1331 = vunpack.c.l.b16 %v382
    %v1332 = vunpack.c.l.b16 %v383
    %v1333 = vunpack.c.l.b16 %v384
    %v1334 = vunpack.c.l.b16 %v385
    %v1335 = vunpack.c.l.b16 %v386
    %v1336 = vunpack.c.l.b16 %v387
    %v1337 = vunpack.c.l.b16 %v388
    %v1338 = vunpack.c.l.b16 %v389
    %v1339 = vunpack.c.l.b16 %v390
    %v1340 = vunpack.c.l.b16 %v391
    %v1341 = vunpack.c.l.b16 %v392
    %v1342 = vunpack.c.l.b16 %v393
    %v1343 = vunpack.c.l.b16 %v394
    %v1344 = vunpack.c.l.b16 %v395
    %v1345 = vunpack.c.l.b16 %v396
    %v1346 = vunpack.c.l.b16 %v397
    %v1347 = vunpack.c.l.b16 %v398
    %v1348 = vunpack.c.l.b16 %v399
    %v1349 = vunpack.c.l.b16 %v400
    %v1350 = vunpack.c.l.b16 %v401
    %v1351 = vunpack.c.l.b16 %v402
    %v1352 = vunpack.c.l.b16 %v403
    %v1353 = vunpack.c.l.b16 %v404
    %v1354 = vunpack.c.l.b16 %v405
    %v1355 = vunpack.c.l.b16 %v406
    %v1356 = vunpack.c.l.b16 %v407
    %v1357 = vunpack.c.l.b16 %v408
    %v1358 = vunpack.c.l.b16 %v409
    %v1359 = vunpack.c.l.b16 %v410
    %v1360 = vunpack.c.l.b16 %v411
    %v1361 = vunpack.c.l.b16 %v412
    %v1362 = vunpack.c.l.b16 %v413
    %v1363 = vunpack.c.l.b16 %v414
    %v1364 = vunpack.c.l.b16 %v415
    %v1365 = vunpack.c.l.b16 %v416
    %v1366 = vunpack.c.l.b16 %v417
    %v1367 = vunpack.c.l.b16 %v418
    %v1368 = vunpack.c.l.b16 %v419
    %v1369 = vunpack.c.l.b16 %v420
    %v1370 = vunpack.c.l.b16 %v421
    %v1371 = vunpack.c.l.b16 %v422
    %v1372 = vunpack.c.l.b16 %v423
    %v1373 = vunpack.c.l.b16 %v424
    %v1374 = vunpack.c.l.b16 %v425
    %v1375 = vunpack.c.l.b16 %v426
    %v1376 = vunpack.c.l.b16 %v427
    %v1377 = vunpack.c.l.b16 %v428
    %v1378 = vpack.c.b16 %v995, %v994
    %v1379 = vpack.c.b16 %v997, %v996
    %v1380 = vpack.c.b16 %v999, %v998
    %v1381 = vpack.c.b16 %v1001, %v1000
    %v1382 = vpack.c.b16 %v1003, %v1002
    %v1383 = vpack.c.b16 %v1005, %v1004
    %v1384 = vpack.c.b16 %v1007, %v1006
    %v1385 = vpack.c.b16 %v1009, %v1008
    %v1386 = vpack.c.b16 %v1011, %v1010
    %v1387 = vpack.c.b16 %v1013, %v1012
    %v1388 = vpack.c.b16 %v1015, %v1014
    %v1389 = vpack.c.b16 %v1017, %v1016
    %v1390 = vpack.c.b16 %v1019, %v1018
    %v1391 = vpack.c.b16 %v1021, %v1020
    %v1392 = vpack.c.b16 %v1023, %v1022
    %v1393 = vpack.c.b16 %v1025, %v1024
    %v1394 = vpack.c.b16 %v1027, %v1026
    %v1395 = vpack.c.b16 %v1029, %v1028
    %v1396 = vpack.c.b16 %v1031, %v1030
    %v1397 = vpack.c.b16 %v1033, %v1032
    %v1398 = vpack.c.b16 %v1035, %v1034
    %v1399 = vpack.c.b16 %v1037, %v1036
    %v1400 = vpack.c.b16 %v1039, %v1038
    %v1401 = vpack.c.b16 %v1041, %v1040
    %v1402 = vpack.c.b16 %v1043, %v1042
    %v1403 = vpack.c.b16 %v1045, %v1044
    %v1404 = vpack.c.b16 %v1047, %v1046
    %v1405 = vpack.c.b16 %v1049, %v1048
    %v1406 = vpack.c.b16 %v1051, %v1050
    %v1407 = vpack.c.b16 %v1053, %v1052
    %v1408 = vpack.c.b16 %v1055, %v1054
    %v1409 = vpack.c.b16 %v1057, %v1056
    %v1410 = vpack.c.b16 %v1059, %v1058
    %v1411 = vpack.c.b16 %v1061, %v1060
    %v1412 = vpack.c.b16 %v1063, %v1062
    %v1413 = vpack.c.b16 %v1065, %v1064
    %v1414 = vpack.c.b16 %v1067, %v1066
    %v1415 = vpack.c.b16 %v1069, %v1068
    %v1416 = vpack.c.b16 %v1071, %v1070
    %v1417 = vpack.c.b16 %v1073, %v1072
    %v1418 = vpack.c.b16 %v1075, %v1074
    %v1419 = vpack.c.b16 %v1077, %v1076
    %v1420 = vpack.c.b16 %v1079, %v1078
    %v1421 = vpack.c.b16 %v1081, %v1080
    %v1422 = vpack.c.b16 %v1083, %v1082
    %v1423 = vpack.c.b16 %v1085, %v1084
    %v1424 = vpack.c.b16 %v1087, %v1086
    %v1425 = vpack.c.b16 %v1089, %v1088
    %v1426 = vpack.c.b16 %v1091, %v1090
    %v1427 = vpack.c.b16 %v1093, %v1092
    %v1428 = vpack.c.b16 %v1095, %v1094
    %v1429 = vpack.c.b16 %v1097, %v1096
    %v1430 = vpack.c.b16 %v1099, %v1098
    %v1431 = vpack.c.b16 %v1101, %v1100
    %v1432 = vpack.c.b16 %v1103, %v1102
    %v1433 = vpack.c.b16 %v1105, %v1104
    %v1434 = vpack.c.b16 %v1107, %v1106
    %v1435 = vpack.c.b16 %v1109, %v1108
    %v1436 = vpack.c.b16 %v1111, %v1110
    %v1437 = vpack.c.b16 %v1113, %v1112
    %v1438 = vpack.c.b16 %v1115, %v1114
    %v1439 = vpack.c.b16 %v1117, %v1116
    %v1440 = vpack.c.b16 %v1119, %v1118
    %v1441 = vpack.c.b16 %v1121, %v1120
    %v1442 = vpack.c.b16 %v1123, %v1122
    %v1443 = vpack.c.b16 %v1125, %v1124
    %v1444 = vpack.c.b16 %v1127, %v1126
    %v1445 = vpack.c.b16 %v1129, %v1128
    %v1446 = vpack.c.b16 %v1131, %v1130
    %v1447 = vpack.c.b16 %v1133, %v1132
    %v1448 = vpack.c.b16 %v1135, %v1134
    %v1449 = vpack.c.b16 %v1137, %v1136
    %v1450 = vpack.c.b16 %v1139, %v1138
    %v1451 = vpack.c.b16 %v1141, %v1140
    %v1452 = vpack.c.b16 %v1143, %v1142
    %v1453 = vpack.c.b16 %v1145, %v1144
    %v1454 = vpack.c.b16 %v1147, %v1146
    %v1455 = vpack.c.b16 %v1149, %v1148
    %v1456 = vpack.c.b16 %v1151, %v1150
    %v1457 = vpack.c.b16 %v1153, %v1152
    %v1458 = vpack.c.b16 %v1155, %v1154
    %v1459 = vpack.c.b16 %v1157, %v1156
    %v1460 = vpack.c.b16 %v1159, %v1158
    %v1461 = vpack.c.b16 %v1161, %v1160
    %v1462 = vpack.c.b16 %v1163, %v1162
    %v1463 = vpack.c.b16 %v1165, %v1164
    %v1464 = vpack.c.b16 %v1167, %v1166
    %v1465 = vpack.c.b16 %v1169, %v1168
    %v1466 = vpack.c.b16 %v1171, %v1170
    %v1467 = vpack.c.b16 %v1173, %v1172
    %v1468 = vpack.c.b16 %v1175, %v1174
    %v1469 = vpack.c.b16 %v1177, %v1176
    %v1470 = vpack.c.b16 %v1179, %v1178
    %v1471 = vpack.c.b16 %v1181, %v1180
    %v1472 = vpack.c.b16 %v1183, %v1182
    %v1473 = vpack.c.b16 %v1185, %v1184
    %v1474 = vpack.c.b16 %v1187, %v1186
    %v1475 = vpack.c.b16 %v1189, %v1188
    %v1476 = vpack.c.b16 %v1191, %v1190
    %v1477 = vpack.c.b16 %v1193, %v1192
    %v1478 = vpack.c.b16 %v1195, %v1194
    %v1479 = vpack.c.b16 %v1197, %v1196
    %v1480 = vpack.c.b16 %v1199, %v1198
    %v1481 = vpack.c.b16 %v1201, %v1200
    %v1482 = vpack.c.b16 %v1203, %v1202
    %v1483 = vpack.c.b16 %v1205, %v1204
    %v1484 = vpack.c.b16 %v1207, %v1206
    %v1485 = vpack.c.b16 %v1209, %v1208
    %v1486 = vpack.c.b16 %v1211, %v1210
    %v1487 = vpack.c.b16 %v1213, %v1212
    %v1488 = vpack.c.b16 %v1215, %v1214
    %v1489 = vpack.c.b16 %v1217, %v1216
    %v1490 = vpack.c.b16 %v1219, %v1218
    %v1491 = vpack.c.b16 %v1221, %v1220
    %v1492 = vpack.c.b16 %v1223, %v1222
    %v1493 = vpack.c.b16 %v1225, %v1224
    %v1494 = vpack.c.b16 %v1227, %v1226
    %v1495 = vpack.c.b16 %v1229, %v1228
    %v1496 = vpack.c.b16 %v1231, %v1230
    %v1497 = vpack.c.b16 %v1233, %v1232
    %v1498 = vpack.c.b16 %v1235, %v1234
    %v1499 = vpack.c.b16 %v1237, %v1236
    %v1500 = vpack.c.b16 %v1239, %v1238
    %v1501 = vpack.c.b16 %v1241, %v1240
    %v1502 = vpack.c.b16 %v1243, %v1242
    %v1503 = vpack.c.b16 %v1245, %v1244
    %v1504 = vpack.c.b16 %v1247, %v1246
    %v1505 = vpack.c.b16 %v1249, %v1248
    %v1506 = vpack.c.b16 %v1251, %v1250
    %v1507 = vpack.c.b16 %v1253, %v1252
    %v1508 = vpack.c.b16 %v1255, %v1254
    %v1509 = vpack.c.b16 %v1257, %v1256
    %v1510 = vpack.c.b16 %v1259, %v1258
    %v1511 = vpack.c.b16 %v1261, %v1260
    %v1512 = vpack.c.b16 %v1263, %v1262
    %v1513 = vpack.c.b16 %v1265, %v1264
    %v1514 = vpack.c.b16 %v1267, %v1266
    %v1515 = vpack.c.b16 %v1269, %v1268
    %v1516 = vpack.c.b16 %v1271, %v1270
    %v1517 = vpack.c.b16 %v1273, %v1272
    %v1518 = vpack.c.b16 %v1275, %v1274
    %v1519 = vpack.c.b16 %v1277, %v1276
    %v1520 = vpack.c.b16 %v1279, %v1278
    %v1521 = vpack.c.b16 %v1281, %v1280
    %v1522 = vpack.c.b16 %v1283, %v1282
    %v1523 = vpack.c.b16 %v1285, %v1284
    %v1524 = vpack.c.b16 %v1287, %v1286
    %v1525 = vpack.c.b16 %v1289, %v1288
    %v1526 = vpack.c.b16 %v1291, %v1290
    %v1527 = vpack.c.b16 %v1293, %v1292
    %v1528 = vpack.c.b16 %v1295, %v1294
    %v1529 = vpack.c.b16 %v1297, %v1296
    %v1530 = vpack.c.b16 %v1299, %v1298
    %v1531 = vpack.c.b16 %v1301, %v1300
    %v1532 = vpack.c.b16 %v1303, %v1302
    %v1533 = vpack.c.b16 %v1305, %v1304
    %v1534 = vpack.c.b16 %v1307, %v1306
    %v1535 = vpack.c.b16 %v1309, %v1308
    %v1536 = vpack.c.b16 %v1311, %v1310
    %v1537 = vpack.c.b16 %v1313, %v1312
    %v1538 = vpack.c.b16 %v1315, %v1314
    %v1539 = vpack.c.b16 %v1317, %v1316
    %v1540 = vpack.c.b16 %v1319, %v1318
    %v1541 = vpack.c.b16 %v1321, %v1320
    %v1542 = vpack.c.b16 %v1323, %v1322
    %v1543 = vpack.c.b16 %v1325, %v1324
    %v1544 = vpack.c.b16 %v1327, %v1326
    %v1545 = vpack.c.b16 %v1329, %v1328
    %v1546 = vpack.c.b16 %v1331, %v1330
    %v1547 = vpack.c.b16 %v1333, %v1332
    %v1548 = vpack.c.b16 %v1335, %v1334
    %v1549 = vpack.c.b16 %v1337, %v1336
    %v1550 = vpack.c.b16 %v1339, %v1338
    %v1551 = vpack.c.b16 %v1341, %v1340
    %v1552 = vpack.c.b16 %v1343, %v1342
    %v1553 = vpack.c.b16 %v1345, %v1344
    %v1554 = vpack.c.b16 %v1347, %v1346
    %v1555 = vpack.c.b16 %v1349, %v1348
    %v1556 = vpack.c.b16 %v1351, %v1350
    %v1557 = vpack.c.b16 %v1353, %v1352
    %v1558 = vpack.c.b16 %v1355, %v1354
    %v1559 = vpack.c.b16 %v1357, %v1356
    %v1560 = vpack.c.b16 %v1359, %v1358
    %v1561 = vpack.c.b16 %v1361, %v1360
    %v1562 = vpack.c.b16 %v1363, %v1362
    %v1563 = vpack.c.b16 %v1365, %v1364
    %v1564 = vpack.c.b16 %v1367, %v1366
    %v1565 = vpack.c.b16 %v1369, %v1368
    %v1566 = vpack.c.b16 %v1371, %v1370
    %v1567 = vpack.c.b16 %v1373, %v1372
    %v1568 = vpack.c.b16 %v1375, %v1374
    %v1569 = vpack.c.b16 %v1377, %v1376
    %1762 = vmatprep.subr.bf16.mxu0 0
    %1763 = vmatpush1.bf16.msra.mxu0 %v1378
    %1764 = vmatprep.subr.bf16.mxu0 0
    %1765 = vmatpush1.bf16.msra.mxu0 %v1379
    %1766 = vmatprep.subr.bf16.mxu0 0
    %1767 = vmatpush1.bf16.msra.mxu0 %v1380
    %1768 = vmatprep.subr.bf16.mxu0 0
    %1769 = vmatpush1.bf16.msra.mxu0 %v1381
    %1770 = vmatprep.subr.bf16.mxu0 0
    %1771 = vmatpush1.bf16.msra.mxu0 %v1382
    %1772 = vmatprep.subr.bf16.mxu0 0
    %1773 = vmatpush1.bf16.msra.mxu0 %v1383
    %1774 = vmatprep.subr.bf16.mxu0 0
    %1775 = vmatpush1.bf16.msra.mxu0 %v1384
    %1776 = vmatprep.subr.bf16.mxu0 0
    %1777 = vmatpush1.bf16.msra.mxu0 %v1385
    %1778 = vmatprep.subr.bf16.mxu0 0
    %1779 = vmatpush1.bf16.msra.mxu0 %v1386
    %1780 = vmatprep.subr.bf16.mxu0 0
    %1781 = vmatpush1.bf16.msra.mxu0 %v1387
    %1782 = vmatprep.subr.bf16.mxu0 0
    %1783 = vmatpush1.bf16.msra.mxu0 %v1388
    %1784 = vmatprep.subr.bf16.mxu0 0
    %1785 = vmatpush1.bf16.msra.mxu0 %v1389
    %1786 = vmatprep.subr.bf16.mxu0 0
    %1787 = vmatpush1.bf16.msra.mxu0 %v1390
    %1788 = vmatprep.subr.bf16.mxu0 0
    %1789 = vmatpush1.bf16.msra.mxu0 %v1391
    %1790 = vmatprep.subr.bf16.mxu0 0
    %1791 = vmatpush1.bf16.msra.mxu0 %v1392
    %1792 = vmatprep.subr.bf16.mxu0 0
    %1793 = vmatpush1.bf16.msra.mxu0 %v1393
    %1794 = vmatprep.mubr.bf16.mxu0 %v476
    %1795 = vmatmul.mubr.bf16.gmra.mrb[0].mxu0 %v462
    %v1796 = vpop.f32.mrb[0].mxu0
    %v1797 = vadd.f32 %v434, %v1796
    %v1798 = vpop.f32.mrb[0].mxu0
    %v1799 = vpop.f32.mrb[0].mxu0
    %v1800 = vpop.f32.mrb[0].mxu0
    %1801 = vdwg.mxu0
    %1802 = vmatprep.subr.bf16.mxu0 0
    %1803 = vmatpush1.bf16.msra.mxu0 %v1394
    %1804 = vmatprep.subr.bf16.mxu0 0
    %1805 = vmatpush1.bf16.msra.mxu0 %v1395
    %1806 = vmatprep.subr.bf16.mxu0 0
    %1807 = vmatpush1.bf16.msra.mxu0 %v1396
    %1808 = vmatprep.subr.bf16.mxu0 0
    %1809 = vmatpush1.bf16.msra.mxu0 %v1397
    %1810 = vmatprep.subr.bf16.mxu0 0
    %1811 = vmatpush1.bf16.msra.mxu0 %v1398
    %1812 = vmatprep.subr.bf16.mxu0 0
    %1813 = vmatpush1.bf16.msra.mxu0 %v1399
    %1814 = vmatprep.subr.bf16.mxu0 0
    %1815 = vmatpush1.bf16.msra.mxu0 %v1400
    %1816 = vmatprep.subr.bf16.mxu0 0
    %1817 = vmatpush1.bf16.msra.mxu0 %v1401
    %1818 = vmatprep.subr.bf16.mxu0 0
    %1819 = vmatpush1.bf16.msra.mxu0 %v1402
    %1820 = vmatprep.subr.bf16.mxu0 0
    %1821 = vmatpush1.bf16.msra.mxu0 %v1403
    %1822 = vmatprep.subr.bf16.mxu0 0
    %1823 = vmatpush1.bf16.msra.mxu0 %v1404
    %1824 = vmatprep.subr.bf16.mxu0 0
    %1825 = vmatpush1.bf16.msra.mxu0 %v1405
    %1826 = vmatprep.subr.bf16.mxu0 0
    %1827 = vmatpush1.bf16.msra.mxu0 %v1406
    %1828 = vmatprep.subr.bf16.mxu0 0
    %1829 = vmatpush1.bf16.msra.mxu0 %v1407
    %1830 = vmatprep.subr.bf16.mxu0 0
    %1831 = vmatpush1.bf16.msra.mxu0 %v1408
    %1832 = vmatprep.subr.bf16.mxu0 0
    %1833 = vmatpush1.bf16.msra.mxu0 %v1409
    %1834 = vmatprep.mubr.bf16.mxu0 %v486
    %1835 = vmatmul.mubr.bf16.gmra.mrb[0].mxu0 %v484
    %v1836 = vpop.f32.mrb[0].mxu0
    %v1837 = vadd.f32 %v1797, %v1836
    %v1838 = vpop.f32.mrb[0].mxu0
    %v1839 = vpop.f32.mrb[0].mxu0
    %v1840 = vpop.f32.mrb[0].mxu0
    %1841 = vdwg.mxu0
    %1842 = vmatprep.subr.bf16.mxu0 0
    %1843 = vmatpush1.bf16.msra.mxu0 %v1410
    %1844 = vmatprep.subr.bf16.mxu0 0
    %1845 = vmatpush1.bf16.msra.mxu0 %v1411
    %1846 = vmatprep.subr.bf16.mxu0 0
    %1847 = vmatpush1.bf16.msra.mxu0 %v1412
    %1848 = vmatprep.subr.bf16.mxu0 0
    %1849 = vmatpush1.bf16.msra.mxu0 %v1413
    %1850 = vmatprep.subr.bf16.mxu0 0
    %1851 = vmatpush1.bf16.msra.mxu0 %v1414
    %1852 = vmatprep.subr.bf16.mxu0 0
    %1853 = vmatpush1.bf16.msra.mxu0 %v1415
    %1854 = vmatprep.subr.bf16.mxu0 0
    %1855 = vmatpush1.bf16.msra.mxu0 %v1416
    %1856 = vmatprep.subr.bf16.mxu0 0
    %1857 = vmatpush1.bf16.msra.mxu0 %v1417
    %1858 = vmatprep.subr.bf16.mxu0 0
    %1859 = vmatpush1.bf16.msra.mxu0 %v1418
    %1860 = vmatprep.subr.bf16.mxu0 0
    %1861 = vmatpush1.bf16.msra.mxu0 %v1419
    %1862 = vmatprep.subr.bf16.mxu0 0
    %1863 = vmatpush1.bf16.msra.mxu0 %v1420
    %1864 = vmatprep.subr.bf16.mxu0 0
    %1865 = vmatpush1.bf16.msra.mxu0 %v1421
    %1866 = vmatprep.subr.bf16.mxu0 0
    %1867 = vmatpush1.bf16.msra.mxu0 %v1422
    %1868 = vmatprep.subr.bf16.mxu0 0
    %1869 = vmatpush1.bf16.msra.mxu0 %v1423
    %1870 = vmatprep.subr.bf16.mxu0 0
    %1871 = vmatpush1.bf16.msra.mxu0 %v1424
    %1872 = vmatprep.subr.bf16.mxu0 0
    %1873 = vmatpush1.bf16.msra.mxu0 %v1425
    %1874 = vmatprep.mubr.bf16.mxu0 %v483
    %1875 = vmatmul.mubr.bf16.gmra.mrb[0].mxu0 %v469
    %v1876 = vpop.f32.mrb[0].mxu0
    %v1877 = vadd.f32 %v1837, %v1876
    %v1878 = vpop.f32.mrb[0].mxu0
    %v1879 = vpop.f32.mrb[0].mxu0
    %v1880 = vpop.f32.mrb[0].mxu0
    %1881 = vdwg.mxu0
    %1882 = vmatprep.subr.bf16.mxu0 0
    %1883 = vmatpush1.bf16.msra.mxu0 %v1426
    %1884 = vmatprep.subr.bf16.mxu0 0
    %1885 = vmatpush1.bf16.msra.mxu0 %v1427
    %1886 = vmatprep.subr.bf16.mxu0 0
    %1887 = vmatpush1.bf16.msra.mxu0 %v1428
    %1888 = vmatprep.subr.bf16.mxu0 0
    %1889 = vmatpush1.bf16.msra.mxu0 %v1429
    %1890 = vmatprep.subr.bf16.mxu0 0
    %1891 = vmatpush1.bf16.msra.mxu0 %v1430
    %1892 = vmatprep.subr.bf16.mxu0 0
    %1893 = vmatpush1.bf16.msra.mxu0 %v1431
    %1894 = vmatprep.subr.bf16.mxu0 0
    %1895 = vmatpush1.bf16.msra.mxu0 %v1432
    %1896 = vmatprep.subr.bf16.mxu0 0
    %1897 = vmatpush1.bf16.msra.mxu0 %v1433
    %1898 = vmatprep.subr.bf16.mxu0 0
    %1899 = vmatpush1.bf16.msra.mxu0 %v1434
    %1900 = vmatprep.subr.bf16.mxu0 0
    %1901 = vmatpush1.bf16.msra.mxu0 %v1435
    %1902 = vmatprep.subr.bf16.mxu0 0
    %1903 = vmatpush1.bf16.msra.mxu0 %v1436
    %1904 = vmatprep.subr.bf16.mxu0 0
    %1905 = vmatpush1.bf16.msra.mxu0 %v1437
    %1906 = vmatprep.subr.bf16.mxu0 0
    %1907 = vmatpush1.bf16.msra.mxu0 %v1438
    %1908 = vmatprep.subr.bf16.mxu0 0
    %1909 = vmatpush1.bf16.msra.mxu0 %v1439
    %1910 = vmatprep.subr.bf16.mxu0 0
    %1911 = vmatpush1.bf16.msra.mxu0 %v1440
    %1912 = vmatprep.subr.bf16.mxu0 0
    %1913 = vmatpush1.bf16.msra.mxu0 %v1441
    %1914 = vmatprep.mubr.bf16.mxu0 %v487
    %1915 = vmatmul.mubr.bf16.gmra.mrb[0].mxu0 %v485
    %v1916 = vpop.f32.mrb[0].mxu0
    %v1917 = vadd.f32 %v1877, %v1916
    %v1918 = vpop.f32.mrb[0].mxu0
    %v1919 = vpop.f32.mrb[0].mxu0
    %v1920 = vpop.f32.mrb[0].mxu0
    %1921 = vdwg.mxu0
    %1922 = vmatprep.subr.bf16.mxu0 0
    %1923 = vmatpush1.bf16.msra.mxu0 %v1442
    %1924 = vmatprep.subr.bf16.mxu0 0
    %1925 = vmatpush1.bf16.msra.mxu0 %v1443
    %1926 = vmatprep.subr.bf16.mxu0 0
    %1927 = vmatpush1.bf16.msra.mxu0 %v1444
    %1928 = vmatprep.subr.bf16.mxu0 0
    %1929 = vmatpush1.bf16.msra.mxu0 %v1445
    %1930 = vmatprep.subr.bf16.mxu0 0
    %1931 = vmatpush1.bf16.msra.mxu0 %v1446
    %1932 = vmatprep.subr.bf16.mxu0 0
    %1933 = vmatpush1.bf16.msra.mxu0 %v1447
    %1934 = vmatprep.subr.bf16.mxu0 0
    %1935 = vmatpush1.bf16.msra.mxu0 %v1448
    %1936 = vmatprep.subr.bf16.mxu0 0
    %1937 = vmatpush1.bf16.msra.mxu0 %v1449
    %1938 = vmatprep.subr.bf16.mxu0 0
    %1939 = vmatpush1.bf16.msra.mxu0 %v1450
    %1940 = vmatprep.subr.bf16.mxu0 0
    %1941 = vmatpush1.bf16.msra.mxu0 %v1451
    %1942 = vmatprep.subr.bf16.mxu0 0
    %1943 = vmatpush1.bf16.msra.mxu0 %v1452
    %1944 = vmatprep.subr.bf16.mxu0 0
    %1945 = vmatpush1.bf16.msra.mxu0 %v1453
    %1946 = vmatprep.subr.bf16.mxu0 0
    %1947 = vmatpush1.bf16.msra.mxu0 %v1454
    %1948 = vmatprep.subr.bf16.mxu0 0
    %1949 = vmatpush1.bf16.msra.mxu0 %v1455
    %1950 = vmatprep.subr.bf16.mxu0 0
    %1951 = vmatpush1.bf16.msra.mxu0 %v1456
    %1952 = vmatprep.subr.bf16.mxu0 0
    %1953 = vmatpush1.bf16.msra.mxu0 %v1457
    %1954 = vmatprep.mubr.bf16.mxu0 %v525
    %1955 = vmatmul.mubr.bf16.gmra.mrb[0].mxu0 %v511
    %v1956 = vpop.f32.mrb[0].mxu0
    %v1957 = vadd.f32 %v1917, %v1956
    %v1958 = vpop.f32.mrb[0].mxu0
    %v1959 = vpop.f32.mrb[0].mxu0
    %v1960 = vpop.f32.mrb[0].mxu0
    %1961 = vdwg.mxu0
    %1962 = vmatprep.subr.bf16.mxu0 0
    %1963 = vmatpush1.bf16.msra.mxu0 %v1458
    %1964 = vmatprep.subr.bf16.mxu0 0
    %1965 = vmatpush1.bf16.msra.mxu0 %v1459
    %1966 = vmatprep.subr.bf16.mxu0 0
    %1967 = vmatpush1.bf16.msra.mxu0 %v1460
    %1968 = vmatprep.subr.bf16.mxu0 0
    %1969 = vmatpush1.bf16.msra.mxu0 %v1461
    %1970 = vmatprep.subr.bf16.mxu0 0
    %1971 = vmatpush1.bf16.msra.mxu0 %v1462
    %1972 = vmatprep.subr.bf16.mxu0 0
    %1973 = vmatpush1.bf16.msra.mxu0 %v1463
    %1974 = vmatprep.subr.bf16.mxu0 0
    %1975 = vmatpush1.bf16.msra.mxu0 %v1464
    %1976 = vmatprep.subr.bf16.mxu0 0
    %1977 = vmatpush1.bf16.msra.mxu0 %v1465
    %1978 = vmatprep.subr.bf16.mxu0 0
    %1979 = vmatpush1.bf16.msra.mxu0 %v1466
    %1980 = vmatprep.subr.bf16.mxu0 0
    %1981 = vmatpush1.bf16.msra.mxu0 %v1467
    %1982 = vmatprep.subr.bf16.mxu0 0
    %1983 = vmatpush1.bf16.msra.mxu0 %v1468
    %1984 = vmatprep.subr.bf16.mxu0 0
    %1985 = vmatpush1.bf16.msra.mxu0 %v1469
    %1986 = vmatprep.subr.bf16.mxu0 0
    %1987 = vmatpush1.bf16.msra.mxu0 %v1470
    %1988 = vmatprep.subr.bf16.mxu0 0
    %1989 = vmatpush1.bf16.msra.mxu0 %v1471
    %1990 = vmatprep.subr.bf16.mxu0 0
    %1991 = vmatpush1.bf16.msra.mxu0 %v1472
    %1992 = vmatprep.subr.bf16.mxu0 0
    %1993 = vmatpush1.bf16.msra.mxu0 %v1473
    %1994 = vmatprep.mubr.bf16.mxu0 %v535
    %1995 = vmatmul.mubr.bf16.gmra.mrb[0].mxu0 %v533
    %v1996 = vpop.f32.mrb[0].mxu0
    %v1997 = vadd.f32 %v1957, %v1996
    %v1998 = vpop.f32.mrb[0].mxu0
    %v1999 = vpop.f32.mrb[0].mxu0
    %v2000 = vpop.f32.mrb[0].mxu0
    %2001 = vdwg.mxu0
    %2002 = vmatprep.subr.bf16.mxu0 0
    %2003 = vmatpush1.bf16.msra.mxu0 %v1474
    %2004 = vmatprep.subr.bf16.mxu0 0
    %2005 = vmatpush1.bf16.msra.mxu0 %v1475
    %2006 = vmatprep.subr.bf16.mxu0 0
    %2007 = vmatpush1.bf16.msra.mxu0 %v1476
    %2008 = vmatprep.subr.bf16.mxu0 0
    %2009 = vmatpush1.bf16.msra.mxu0 %v1477
    %2010 = vmatprep.subr.bf16.mxu0 0
    %2011 = vmatpush1.bf16.msra.mxu0 %v1478
    %2012 = vmatprep.subr.bf16.mxu0 0
    %2013 = vmatpush1.bf16.msra.mxu0 %v1479
    %2014 = vmatprep.subr.bf16.mxu0 0
    %2015 = vmatpush1.bf16.msra.mxu0 %v1480
    %2016 = vmatprep.subr.bf16.mxu0 0
    %2017 = vmatpush1.bf16.msra.mxu0 %v1481
    %2018 = vmatprep.subr.bf16.mxu0 0
    %2019 = vmatpush1.bf16.msra.mxu0 %v1482
    %2020 = vmatprep.subr.bf16.mxu0 0
    %2021 = vmatpush1.bf16.msra.mxu0 %v1483
    %2022 = vmatprep.subr.bf16.mxu0 0
    %2023 = vmatpush1.bf16.msra.mxu0 %v1484
    %2024 = vmatprep.subr.bf16.mxu0 0
    %2025 = vmatpush1.bf16.msra.mxu0 %v1485
    %2026 = vmatprep.subr.bf16.mxu0 0
    %2027 = vmatpush1.bf16.msra.mxu0 %v1486
    %2028 = vmatprep.subr.bf16.mxu0 0
    %2029 = vmatpush1.bf16.msra.mxu0 %v1487
    %2030 = vmatprep.subr.bf16.mxu0 0
    %2031 = vmatpush1.bf16.msra.mxu0 %v1488
    %2032 = vmatprep.subr.bf16.mxu0 0
    %2033 = vmatpush1.bf16.msra.mxu0 %v1489
    %2034 = vmatprep.mubr.bf16.mxu0 %v532
    %2035 = vmatmul.mubr.bf16.gmra.mrb[0].mxu0 %v518
    %v2036 = vpop.f32.mrb[0].mxu0
    %v2037 = vadd.f32 %v1997, %v2036
    %v2038 = vpop.f32.mrb[0].mxu0
    %v2039 = vpop.f32.mrb[0].mxu0
    %v2040 = vpop.f32.mrb[0].mxu0
    %2041 = vdwg.mxu0
    %2042 = vmatprep.subr.bf16.mxu0 0
    %2043 = vmatpush1.bf16.msra.mxu0 %v1490
    %2044 = vmatprep.subr.bf16.mxu0 0
    %2045 = vmatpush1.bf16.msra.mxu0 %v1491
    %2046 = vmatprep.subr.bf16.mxu0 0
    %2047 = vmatpush1.bf16.msra.mxu0 %v1492
    %2048 = vmatprep.subr.bf16.mxu0 0
    %2049 = vmatpush1.bf16.msra.mxu0 %v1493
    %2050 = vmatprep.subr.bf16.mxu0 0
    %2051 = vmatpush1.bf16.msra.mxu0 %v1494
    %2052 = vmatprep.subr.bf16.mxu0 0
    %2053 = vmatpush1.bf16.msra.mxu0 %v1495
    %2054 = vmatprep.subr.bf16.mxu0 0
    %2055 = vmatpush1.bf16.msra.mxu0 %v1496
    %2056 = vmatprep.subr.bf16.mxu0 0
    %2057 = vmatpush1.bf16.msra.mxu0 %v1497
    %2058 = vmatprep.subr.bf16.mxu0 0
    %2059 = vmatpush1.bf16.msra.mxu0 %v1498
    %2060 = vmatprep.subr.bf16.mxu0 0
    %2061 = vmatpush1.bf16.msra.mxu0 %v1499
    %2062 = vmatprep.subr.bf16.mxu0 0
    %2063 = vmatpush1.bf16.msra.mxu0 %v1500
    %2064 = vmatprep.subr.bf16.mxu0 0
    %2065 = vmatpush1.bf16.msra.mxu0 %v1501
    %2066 = vmatprep.subr.bf16.mxu0 0
    %2067 = vmatpush1.bf16.msra.mxu0 %v1502
    %2068 = vmatprep.subr.bf16.mxu0 0
    %2069 = vmatpush1.bf16.msra.mxu0 %v1503
    %2070 = vmatprep.subr.bf16.mxu0 0
    %2071 = vmatpush1.bf16.msra.mxu0 %v1504
    %2072 = vmatprep.subr.bf16.mxu0 0
    %2073 = vmatpush1.bf16.msra.mxu0 %v1505
    %2074 = vmatprep.mubr.bf16.mxu0 %v536
    %2075 = vmatmul.mubr.bf16.gmra.mrb[0].mxu0 %v534
    %v2076 = vpop.f32.mrb[0].mxu0
    %v2077 = vadd.f32 %v2037, %v2076
    %v2078 = vpop.f32.mrb[0].mxu0
    %v2079 = vpop.f32.mrb[0].mxu0
    %v2080 = vpop.f32.mrb[0].mxu0
    %2081 = vdwg.mxu0
    %2082 = vmatprep.subr.bf16.mxu0 0
    %2083 = vmatpush1.bf16.msra.mxu0 %v1506
    %2084 = vmatprep.subr.bf16.mxu0 0
    %2085 = vmatpush1.bf16.msra.mxu0 %v1507
    %2086 = vmatprep.subr.bf16.mxu0 0
    %2087 = vmatpush1.bf16.msra.mxu0 %v1508
    %2088 = vmatprep.subr.bf16.mxu0 0
    %2089 = vmatpush1.bf16.msra.mxu0 %v1509
    %2090 = vmatprep.subr.bf16.mxu0 0
    %2091 = vmatpush1.bf16.msra.mxu0 %v1510
    %2092 = vmatprep.subr.bf16.mxu0 0
    %2093 = vmatpush1.bf16.msra.mxu0 %v1511
    %2094 = vmatprep.subr.bf16.mxu0 0
    %2095 = vmatpush1.bf16.msra.mxu0 %v1512
    %2096 = vmatprep.subr.bf16.mxu0 0
    %2097 = vmatpush1.bf16.msra.mxu0 %v1513
    %2098 = vmatprep.subr.bf16.mxu0 0
    %2099 = vmatpush1.bf16.msra.mxu0 %v1514
    %2100 = vmatprep.subr.bf16.mxu0 0
    %2101 = vmatpush1.bf16.msra.mxu0 %v1515
    %2102 = vmatprep.subr.bf16.mxu0 0
    %2103 = vmatpush1.bf16.msra.mxu0 %v1516
    %2104 = vmatprep.subr.bf16.mxu0 0
    %2105 = vmatpush1.bf16.msra.mxu0 %v1517
    %2106 = vmatprep.subr.bf16.mxu0 0
    %2107 = vmatpush1.bf16.msra.mxu0 %v1518
    %2108 = vmatprep.subr.bf16.mxu0 0
    %2109 = vmatpush1.bf16.msra.mxu0 %v1519
    %2110 = vmatprep.subr.bf16.mxu0 0
    %2111 = vmatpush1.bf16.msra.mxu0 %v1520
    %2112 = vmatprep.subr.bf16.mxu0 0
    %2113 = vmatpush1.bf16.msra.mxu0 %v1521
    %2114 = vmatprep.mubr.bf16.mxu0 %v574
    %2115 = vmatmul.mubr.bf16.gmra.mrb[0].mxu0 %v560
    %v2116 = vpop.f32.mrb[0].mxu0
    %v2117 = vadd.f32 %v2077, %v2116
    %v2118 = vpop.f32.mrb[0].mxu0
    %v2119 = vpop.f32.mrb[0].mxu0
    %v2120 = vpop.f32.mrb[0].mxu0
    %2121 = vdwg.mxu0
    %2122 = vmatprep.subr.bf16.mxu0 0
    %2123 = vmatpush1.bf16.msra.mxu0 %v1522
    %2124 = vmatprep.subr.bf16.mxu0 0
    %2125 = vmatpush1.bf16.msra.mxu0 %v1523
    %2126 = vmatprep.subr.bf16.mxu0 0
    %2127 = vmatpush1.bf16.msra.mxu0 %v1524
    %2128 = vmatprep.subr.bf16.mxu0 0
    %2129 = vmatpush1.bf16.msra.mxu0 %v1525
    %2130 = vmatprep.subr.bf16.mxu0 0
    %2131 = vmatpush1.bf16.msra.mxu0 %v1526
    %2132 = vmatprep.subr.bf16.mxu0 0
    %2133 = vmatpush1.bf16.msra.mxu0 %v1527
    %2134 = vmatprep.subr.bf16.mxu0 0
    %2135 = vmatpush1.bf16.msra.mxu0 %v1528
    %2136 = vmatprep.subr.bf16.mxu0 0
    %2137 = vmatpush1.bf16.msra.mxu0 %v1529
    %2138 = vmatprep.subr.bf16.mxu0 0
    %2139 = vmatpush1.bf16.msra.mxu0 %v1530
    %2140 = vmatprep.subr.bf16.mxu0 0
    %2141 = vmatpush1.bf16.msra.mxu0 %v1531
    %2142 = vmatprep.subr.bf16.mxu0 0
    %2143 = vmatpush1.bf16.msra.mxu0 %v1532
    %2144 = vmatprep.subr.bf16.mxu0 0
    %2145 = vmatpush1.bf16.msra.mxu0 %v1533
    %2146 = vmatprep.subr.bf16.mxu0 0
    %2147 = vmatpush1.bf16.msra.mxu0 %v1534
    %2148 = vmatprep.subr.bf16.mxu0 0
    %2149 = vmatpush1.bf16.msra.mxu0 %v1535
    %2150 = vmatprep.subr.bf16.mxu0 0
    %2151 = vmatpush1.bf16.msra.mxu0 %v1536
    %2152 = vmatprep.subr.bf16.mxu0 0
    %2153 = vmatpush1.bf16.msra.mxu0 %v1537
    %2154 = vmatprep.mubr.bf16.mxu0 %v584
    %2155 = vmatmul.mubr.bf16.gmra.mrb[0].mxu0 %v582
    %v2156 = vpop.f32.mrb[0].mxu0
    %v2157 = vadd.f32 %v2117, %v2156
    %v2158 = vpop.f32.mrb[0].mxu0
    %v2159 = vpop.f32.mrb[0].mxu0
    %v2160 = vpop.f32.mrb[0].mxu0
    %2161 = vdwg.mxu0
    %2162 = vmatprep.subr.bf16.mxu0 0
    %2163 = vmatpush1.bf16.msra.mxu0 %v1538
    %2164 = vmatprep.subr.bf16.mxu0 0
    %2165 = vmatpush1.bf16.msra.mxu0 %v1539
    %2166 = vmatprep.subr.bf16.mxu0 0
    %2167 = vmatpush1.bf16.msra.mxu0 %v1540
    %2168 = vmatprep.subr.bf16.mxu0 0
    %2169 = vmatpush1.bf16.msra.mxu0 %v1541
    %2170 = vmatprep.subr.bf16.mxu0 0
    %2171 = vmatpush1.bf16.msra.mxu0 %v1542
    %2172 = vmatprep.subr.bf16.mxu0 0
    %2173 = vmatpush1.bf16.msra.mxu0 %v1543
    %2174 = vmatprep.subr.bf16.mxu0 0
    %2175 = vmatpush1.bf16.msra.mxu0 %v1544
    %2176 = vmatprep.subr.bf16.mxu0 0
    %2177 = vmatpush1.bf16.msra.mxu0 %v1545
    %2178 = vmatprep.subr.bf16.mxu0 0
    %2179 = vmatpush1.bf16.msra.mxu0 %v1546
    %2180 = vmatprep.subr.bf16.mxu0 0
    %2181 = vmatpush1.bf16.msra.mxu0 %v1547
    %2182 = vmatprep.subr.bf16.mxu0 0
    %2183 = vmatpush1.bf16.msra.mxu0 %v1548
    %2184 = vmatprep.subr.bf16.mxu0 0
    %2185 = vmatpush1.bf16.msra.mxu0 %v1549
    %2186 = vmatprep.subr.bf16.mxu0 0
    %2187 = vmatpush1.bf16.msra.mxu0 %v1550
    %2188 = vmatprep.subr.bf16.mxu0 0
    %2189 = vmatpush1.bf16.msra.mxu0 %v1551
    %2190 = vmatprep.subr.bf16.mxu0 0
    %2191 = vmatpush1.bf16.msra.mxu0 %v1552
    %2192 = vmatprep.subr.bf16.mxu0 0
    %2193 = vmatpush1.bf16.msra.mxu0 %v1553
    %2194 = vmatprep.mubr.bf16.mxu0 %v581
    %2195 = vmatmul.mubr.bf16.gmra.mrb[0].mxu0 %v567
    %v2196 = vpop.f32.mrb[0].mxu0
    %v2197 = vadd.f32 %v2157, %v2196
    %v2198 = vpop.f32.mrb[0].mxu0
    %v2199 = vpop.f32.mrb[0].mxu0
    %v2200 = vpop.f32.mrb[0].mxu0
    %2201 = vdwg.mxu0
    %2202 = vmatprep.subr.bf16.mxu0 0
    %2203 = vmatpush1.bf16.msra.mxu0 %v1554
    %2204 = vmatprep.subr.bf16.mxu0 0
    %2205 = vmatpush1.bf16.msra.mxu0 %v1555
    %2206 = vmatprep.subr.bf16.mxu0 0
    %2207 = vmatpush1.bf16.msra.mxu0 %v1556
    %2208 = vmatprep.subr.bf16.mxu0 0
    %2209 = vmatpush1.bf16.msra.mxu0 %v1557
    %2210 = vmatprep.subr.bf16.mxu0 0
    %2211 = vmatpush1.bf16.msra.mxu0 %v1558
    %2212 = vmatprep.subr.bf16.mxu0 0
    %2213 = vmatpush1.bf16.msra.mxu0 %v1559
    %2214 = vmatprep.subr.bf16.mxu0 0
    %2215 = vmatpush1.bf16.msra.mxu0 %v1560
    %2216 = vmatprep.subr.bf16.mxu0 0
    %2217 = vmatpush1.bf16.msra.mxu0 %v1561
    %2218 = vmatprep.subr.bf16.mxu0 0
    %2219 = vmatpush1.bf16.msra.mxu0 %v1562
    %2220 = vmatprep.subr.bf16.mxu0 0
    %2221 = vmatpush1.bf16.msra.mxu0 %v1563
    %2222 = vmatprep.subr.bf16.mxu0 0
    %2223 = vmatpush1.bf16.msra.mxu0 %v1564
    %2224 = vmatprep.subr.bf16.mxu0 0
    %2225 = vmatpush1.bf16.msra.mxu0 %v1565
    %2226 = vmatprep.subr.bf16.mxu0 0
    %2227 = vmatpush1.bf16.msra.mxu0 %v1566
    %2228 = vmatprep.subr.bf16.mxu0 0
    %2229 = vmatpush1.bf16.msra.mxu0 %v1567
    %2230 = vmatprep.subr.bf16.mxu0 0
    %2231 = vmatpush1.bf16.msra.mxu0 %v1568
    %2232 = vmatprep.subr.bf16.mxu0 0
    %2233 = vmatpush1.bf16.msra.mxu0 %v1569
    %2234 = vmatprep.mubr.bf16.mxu0 %v585
    %2235 = vmatmul.mubr.bf16.gmra.mrb[0].mxu0 %v583
    %v2236 = vpop.f32.mrb[0].mxu0
    %v2237 = vadd.f32 %v2197, %v2236
    %v2238 = vpop.f32.mrb[0].mxu0
    %v2239 = vpop.f32.mrb[0].mxu0
    %v2240 = vpop.f32.mrb[0].mxu0
    %2241 = vdwg.mxu0
    %2242 = vst [vmem:[#allocation7] sm:$0x3] %v2237
    // Predicated region
    $region22: #{tpu_custom_call.1} parent=1 // pred_check
      _
    $region23: #{tpu_custom_call.1} parent=1 // pred_check_branch
      %2244 = sbr.rel (0) target = $region25
    $region24: #{tpu_custom_call.1} parent=1 // pred_region
      %s2246 = ssub.s32 32, 32
      %2247 = vsyncadd [#allocation4], %s2246
      %s2249 = sshll.u32 [#allocation7], 4
      %s2250 = int_to_ptr.vmem [resolvable:$true] %s2249
      %2252 = dma.vmem_to_hbm [thread:$0]  %s2250, 32, %s3, [#allocation4]
    $region25: #{tpu_custom_call.1} parent=1 // pred_fallthru
      _
    // Predicated region
    $region26: #{tpu_custom_call.1} parent=1 // pred_check
      _
    $region27: #{tpu_custom_call.1} parent=1 // pred_check_branch
      %2254 = sbr.rel (0) target = $region29
    $region28: #{tpu_custom_call.1} parent=1 // pred_region
      %2255 = dma.done [#allocation4], 32
    $region29: #{tpu_custom_call.1} parent=1 // pred_fallthru
      _
    %2256 = vsyncpa [#allocation3], 1
    %2257 = vsyncpa [#allocation6], 1
    %2258 = vsyncpa [#allocation4], 1

</llo_original>
